<compile_context>
chip_gen: v5e
topology: v5e:2x2
jax: 0.10.0
libtpu: 0.0.40
codegen_flags: <defaults>
</compile_context>

<pallas_src>
import math
from functools import partial

import jax
import jax.numpy as jnp
from jax.experimental import pallas as pl
from jax.experimental.pallas import tpu as pltpu

_VMEM_LIMIT = 48 * 1024 * 1024          # explicit scoped-VMEM limit (<= v7x 64 MiB)
_FUSED_VMEM_BUDGET = 40 * 1024 * 1024   # fused conv kernel used below this footprint
_K_SINGLE_MAX = 4096                    # single full-extent K block up to this size


def _round_up(x, m):
    return ((x + m - 1) // m) * m


# ----------------------------------------------------------------------------
# Fused-im2col conv kernel (stride (1,1), valid padding).  Grid = (N,).
# ----------------------------------------------------------------------------
def _qconv_fused_kernel(x_ref, w_ref, b_ref, o_ref, *, kH, kW, W, m_rows, cin,
                        activation):
    # x_ref : (1, H*W + kW-1, cin)  bf16 flattened (row-major) image + tail pad
    # w_ref : (kH*kW*cin, Cpad)     bf16 flattened conv weight
    # b_ref : (1, Cpad)             f32 bias
    # o_ref : (1, Ho*W, Cpad)       bf16 output; columns w >= Wo are garbage and
    #                               are sliced off by the wrapper.
    cpad = b_ref.shape[-1]
    acc = jnp.broadcast_to(b_ref[...].astype(jnp.float32), (m_rows, cpad))
    for di in range(kH):
        for dj in range(kW):
            idx = di * kW + dj
            shift = di * W + dj
            a = x_ref[0, shift:shift + m_rows, :]          # (m_rows, cin) bf16
            wv = w_ref[idx * cin:(idx + 1) * cin, :]       # (cin, Cpad)  bf16
            acc = acc + jnp.dot(a, wv, preferred_element_type=jnp.float32)
    if activation is not None:
        acc = activation(acc)
    o_ref[...] = acc.astype(o_ref.dtype)[None]


def qconv_fused(x_flat, w_flat, bias_row, *, W, Ho, kH, kW, cin, activation,
                out_dtype=jnp.bfloat16):
    """out[n] = conv(x[n]) for all images, fused im2col, bias & activation."""
    N, R, _ = x_flat.shape
    K, Cpad = w_flat.shape
    m_rows = Ho * W

    kernel = partial(_qconv_fused_kernel, kH=kH, kW=kW, W=W, m_rows=m_rows,
                     cin=cin, activation=activation)
    cost = pl.CostEstimate(
        flops=2 * N * m_rows * K * Cpad,
        transcendentals=0,
        bytes_accessed=N * (R * cin * 2 + K * Cpad * 2 + m_rows * Cpad * 2))

    return pl.pallas_call(
        kernel,
        out_shape=jax.ShapeDtypeStruct((N, m_rows, Cpad), out_dtype),
        grid_spec=pltpu.PrefetchScalarGridSpec(
            num_scalar_prefetch=0,
            grid=(N,),
            in_specs=[
                pl.BlockSpec((1, R, cin), lambda n: (n, 0, 0)),
                pl.BlockSpec((K, Cpad), lambda n: (0, 0)),
                pl.BlockSpec((1, Cpad), lambda n: (0, 0)),
            ],
            out_specs=pl.BlockSpec((1, m_rows, Cpad), lambda n: (n, 0, 0)),
        ),
        compiler_params=pltpu.CompilerParams(
            dimension_semantics=("parallel",),
            vmem_limit_bytes=_VMEM_LIMIT),
        cost_estimate=cost,
    )(x_flat, w_flat, bias_row)


def _fused_vmem_bytes(R, cin, m_rows, K, Cpad):
    x_b = 2 * R * cin * 2            # double-buffered image slab
    w_b = 2 * K * Cpad * 2
    out_b = 2 * m_rows * Cpad * 2
    acc_b = m_rows * Cpad * 4        # f32 accumulator value
    a_b = m_rows * cin * 2
    return x_b + w_b + out_b + acc_b + a_b + (1 << 20)


# ----------------------------------------------------------------------------
# Fallback: (M, N, K)-tiled matmul over a materialized im2col patches array.
# ----------------------------------------------------------------------------
def _qconv_mm_kernel(a_ref, w_ref, b_ref, o_ref, acc_ref, *, activation):
    k = pl.program_id(2)

    @pl.when(k == 0)
    def _init():
        acc_ref[...] = jnp.broadcast_to(b_ref[...], acc_ref.shape)

    acc_ref[...] += jnp.dot(a_ref[...], w_ref[...],
                            preferred_element_type=jnp.float32)

    @pl.when(k == pl.num_programs(2) - 1)
    def _writeback():
        r = acc_ref[...]
        if activation is not None:
            r = activation(r)
        o_ref[...] = r.astype(o_ref.dtype)


def _choose_tk(K, *, max_single=_K_SINGLE_MAX, max_tk=2048):
    """Pick a K block that divides K (never pad the expanded patches on K)."""
    if K <= max_single:
        return K
    t = (max_tk // 128) * 128
    while t >= 128:
        if K % t == 0:
            return t
        t -= 128
    return K


def qconv_matmul(patches, w_flat, bias_row, *, tk, activation=None,
                 out_dtype=jnp.bfloat16, tm=512):
    """out = patches @ w_flat + bias (activation fused), bf16 output."""
    M, K = patches.shape
    _, Cpad = w_flat.shape
    assert Cpad % 128 == 0 and K % tk == 0

    # tn covers Cout whenever it fits -> patches stream from HBM exactly once.
    if Cpad <= 512:
        tn = Cpad
    elif Cpad % 512 == 0:
        tn = 512
    elif Cpad % 256 == 0:
        tn = 256
    else:
        tn = 128

    M_work = M
    if M_work < 8:
        patches = jnp.pad(patches, ((0, 8 - M_work), (0, 0)))
        M_work = 8
    tm = max(8, (min(tm, M_work) // 8) * 8)
    n_j = Cpad // tn
    # v7x has 2 TensorCores sharded over the parallel grid axes: make sure the
    # (i, j) grid has >= 2 blocks when there is enough work.
    if ((M_work + tm - 1) // tm) * n_j < 2 and M_work > 8:
        tm = max(8, _round_up((M_work + 1) // 2, 8))
    n_i = (M_work + tm - 1) // tm

    grid = (n_i, n_j, K // tk)
    cost = pl.CostEstimate(
        flops=2 * M_work * K * Cpad,
        transcendentals=0,
        bytes_accessed=(M_work * K * 2 * n_j        # patches re-read per j block
                        + K * Cpad * 2 * n_i        # weight re-read per i block
                        + M_work * Cpad * 2         # bf16 output
                        + Cpad * 4))

    out = pl.pallas_call(
        partial(_qconv_mm_kernel, activation=activation),
        out_shape=jax.ShapeDtypeStruct((M_work, Cpad), out_dtype),
        grid_spec=pltpu.PrefetchScalarGridSpec(
            num_scalar_prefetch=0,
            grid=grid,
            in_specs=[
                pl.BlockSpec((tm, tk), lambda i, j, k: (i, k)),
                pl.BlockSpec((tk, tn), lambda i, j, k: (k, j)),
                pl.BlockSpec((1, tn), lambda i, j, k: (0, j)),
            ],
            out_specs=pl.BlockSpec((tm, tn), lambda i, j, k: (i, j)),
            scratch_shapes=[pltpu.VMEM((tm, tn), jnp.float32)],
        ),
        compiler_params=pltpu.CompilerParams(
            dimension_semantics=("parallel", "parallel", "arbitrary"),
            vmem_limit_bytes=_VMEM_LIMIT),
        cost_estimate=cost,
    )(patches, w_flat, bias_row)

    # Ragged last M block: garbage rows are dropped here (K is never ragged).
    return out[:M]


# ----------------------------------------------------------------------------
# Glue: parameter init, weight transform, im2col, layout plumbing.
# ----------------------------------------------------------------------------
def init_qconv_params(key, in_size, out_size, kernel_size):
    kH, kW = kernel_size
    cin3 = in_size // 3
    fan_in = cin3 * kH * kW                       # 'he' criterion
    lim = math.sqrt(1.0 / fan_in) * math.sqrt(3.0)
    k1, k2 = jax.random.split(key)
    f_phase = jax.random.uniform(k1, (out_size, cin3, kH, kW),
                                 minval=-lim, maxval=lim, dtype=jnp.float32)
    f_modulus = jax.random.uniform(k2, (out_size, cin3, kH, kW),
                                   minval=-math.pi / 2, maxval=math.pi / 2,
                                   dtype=jnp.float32)
    bias = jnp.zeros((3 * out_size,), dtype=jnp.float32)
    return f_phase, f_modulus, bias


def build_qconv_matrix(f_phase, f_modulus):
    """Reproduces the f1..f9 / matrix construction of the PyTorch forward."""
    p1 = jnp.cos(f_phase)
    p2 = jnp.sin(f_phase) * (3.0 ** 0.5 / 3.0)
    diag = (p1 * p1 - p2 * p2) * f_modulus            # f1 == f5 == f9
    neg = 2.0 * (p2 * p2 - p2 * p1) * f_modulus       # f2 == f6 == f7
    pos = 2.0 * (p2 * p2 + p2 * p1) * f_modulus       # f3 == f4 == f8
    m1 = jnp.concatenate([diag, neg, pos], axis=1)    # f1 f2 f3
    m2 = jnp.concatenate([pos, diag, neg], axis=1)    # f4 f5 f6
    m3 = jnp.concatenate([neg, pos, diag], axis=1)    # f7 f8 f9
    return jnp.concatenate([m1, m2, m3], axis=0)      # (3*out, in, kH, kW)


def _im2col_nhwc(x_nhwc, kernel_size, stride):
    """Valid-padding patches, (N*Ho*Wo, kH*kW*Cin), channel-minor K order."""
    N, H, W, C = x_nhwc.shape
    kH, kW = kernel_size
    sH, sW = stride
    Ho = (H - kH) // sH + 1
    Wo = (W - kW) // sW + 1
    cols = []
    for di in range(kH):
        for dj in range(kW):
            cols.append(x_nhwc[:, di:di + (Ho - 1) * sH + 1:sH,
                                  dj:dj + (Wo - 1) * sW + 1:sW, :])
    patches = jnp.stack(cols, axis=3)                 # (N, Ho, Wo, kH*kW, C)
    return patches.reshape(N * Ho * Wo, kH * kW * C), (N, Ho, Wo)


@partial(jax.jit, static_argnames=("kernel_size", "stride", "activation",
                                   "out_layout", "out_dtype", "path"))
def qconv_forward(x_nchw, f_phase, f_modulus, bias, *, kernel_size, stride,
                  activation=None, out_layout="NCHW", out_dtype=jnp.bfloat16,
                  path="auto"):
    kH, kW = kernel_size
    sH, sW = stride
    N, Cin, H, W = x_nchw.shape
    Ho = (H - kH) // sH + 1
    Wo = (W - kW) // sW + 1
    kHkW = kH * kW

    matrix = build_qconv_matrix(f_phase, f_modulus)   # (Cout, Cin, kH, kW) f32
    Cout = matrix.shape[0]

    # Pad Cin BEFORE im2col so K is 16-aligned (and, when K must be tiled,
    # exactly divisible by a 128-multiple tile) -> the big patches array is
    # never padded along K.
    cmult = 16 // math.gcd(kHkW, 16)
    Cin_pad = _round_up(Cin, cmult)
    if kHkW * Cin_pad > _K_SINGLE_MAX:
        Cin_pad = _round_up(Cin, 128)
    K = kHkW * Cin_pad
    Cpad = _round_up(Cout, 128)                       # lane-dense output stores

    w = matrix
    if Cin_pad != Cin:
        w = jnp.pad(w, ((0, 0), (0, Cin_pad - Cin), (0, 0), (0, 0)))
    # (kH, kW, Cin, Cout) flattening matches the patch K ordering.
    w_flat = w.transpose(2, 3, 1, 0).reshape(K, Cout)
    if Cpad != Cout:
        w_flat = jnp.pad(w_flat, ((0, 0), (0, Cpad - Cout)))
    w_flat = w_flat.astype(jnp.bfloat16)
    b = bias if Cpad == Cout else jnp.pad(bias, (0, Cpad - Cout))
    bias_row = b.reshape(1, Cpad).astype(jnp.float32)

    # bf16 NHWC input (cast before any expansion), padded channels are zero.
    x = jnp.transpose(x_nchw, (0, 2, 3, 1)).astype(jnp.bfloat16)
    if Cin_pad != Cin:
        x = jnp.pad(x, ((0, 0), (0, 0), (0, 0), (0, Cin_pad - Cin)))

    m_rows = Ho * W
    R = H * W + (kW - 1)
    fits = _fused_vmem_bytes(R, Cin_pad, m_rows, K, Cpad) <= _FUSED_VMEM_BUDGET
    if path == "fused":
        if stride != (1, 1):
            raise ValueError("fused path supports stride (1,1) only")
        use_fused = True
    elif path == "matmul":
        use_fused = False
    else:
        use_fused = (stride == (1, 1)) and fits

    if use_fused:
        x_flat = x.reshape(N, H * W, Cin_pad)
        x_flat = jnp.pad(x_flat, ((0, 0), (0, R - H * W), (0, 0)))
        out = qconv_fused(x_flat, w_flat, bias_row, W=W, Ho=Ho, kH=kH, kW=kW,
                          cin=Cin_pad, activation=activation,
                          out_dtype=out_dtype)        # (N, Ho*W, Cpad)
        out = out.reshape(N, Ho, W, Cpad)[:, :, :Wo, :Cout]
    else:
        patches, _ = _im2col_nhwc(x, kernel_size, stride)     # (M, K) bf16
        tk = _choose_tk(K)
        out = qconv_matmul(patches, w_flat, bias_row, tk=tk,
                           activation=activation, out_dtype=out_dtype)
        out = out[:, :Cout].reshape(N, Ho, Wo, Cout)

    if out_layout == "NCHW":
        out = out.transpose(0, 3, 1, 2)
    return out


# ----------------------------------------------------------------------------
if __name__ == "__main__":
    # Small shapes consistent with the module: in_size divisible by 3.
    N, in_size, H, W = 2, 12, 16, 16
    out_size = 4
    kernel_size = (3, 3)
    stride = (1, 1)

    key = jax.random.PRNGKey(0)
    kx, kw_ = jax.random.split(key)
    x = jax.random.normal(kx, (N, in_size, H, W), dtype=jnp.float32)
    f_phase, f_modulus, bias = init_qconv_params(kw_, in_size, out_size,
                                                 kernel_size)

    # Reference: XLA conv with identically bf16-cast operands (f32 accumulate).
    matrix = build_qconv_matrix(f_phase, f_modulus)
    ref = jax.lax.conv_general_dilated(
        x.astype(jnp.bfloat16), matrix.astype(jnp.bfloat16),
        window_strides=stride, padding="VALID",
        dimension_numbers=("NCHW", "OIHW", "NCHW"),
        preferred_element_type=jnp.float32)
    ref = ref + bias.reshape(1, -1, 1, 1)
    ref = jax.block_until_ready(ref)

    for p in ("fused", "matmul"):      # exercise both the fused and fallback paths
        out = qconv_forward(x, f_phase, f_modulus, bias,
                            kernel_size=kernel_size, stride=stride,
                            activation=None, path=p)
        out = jax.block_until_ready(out)
        assert out.shape == (N, 3 * out_size, H - 2, W - 2), (p, out.shape)
        rel_err = (jnp.max(jnp.abs(out.astype(jnp.float32) - ref))
                   / (jnp.max(jnp.abs(ref)) + 1e-6))
        assert float(rel_err) < 2e-2, (p, float(rel_err))

    print("KERNEL_OK")
</pallas_src>

<mosaic_0001>
module attributes {stable_mosaic.version = 11 : i64} {
  func.func @_qconv_fused_kernel(%arg0: i32, %arg1: memref<1x258x16xbf16, #tpu.memory_space<vmem>>, %arg2: memref<144x128xbf16, #tpu.memory_space<vmem>>, %arg3: memref<1x128xf32, #tpu.memory_space<vmem>>, %arg4: memref<1x224x128xbf16, #tpu.memory_space<vmem>>) attributes {dimension_semantics = [#tpu.dimension_semantics<parallel>], iteration_bounds = array<i64: 2>, scalar_prefetch = 0 : i64, scratch_operands = 0 : i64, tpu.core_type = #tpu.core_type<tc>, window_params = [{transform_indices = @transform_0, window_bounds = array<i64: 1, 258, 16>}, {pipeline_mode = #tpu.pipeline_mode<synchronous>, transform_indices = @transform_1, window_bounds = array<i64: 144, 128>}, {pipeline_mode = #tpu.pipeline_mode<synchronous>, transform_indices = @transform_2, window_bounds = array<i64: 1, 128>}, {transform_indices = @transform_3, window_bounds = array<i64: 1, 224, 128>}]} {
    %c0 = arith.constant 0 : index
    %c0_0 = arith.constant 0 : index
    %0 = vector.load %arg3[%c0, %c0_0] : memref<1x128xf32, #tpu.memory_space<vmem>>, vector<1x128xf32>
    %1 = vector.shape_cast %0 : vector<1x128xf32> to vector<1x128xf32>
    %2 = vector.broadcast %1 : vector<1x128xf32> to vector<224x128xf32>
    %c0_1 = arith.constant 0 : index
    %c0_2 = arith.constant 0 : index
    %c0_3 = arith.constant 0 : index
    %3 = vector.load %arg1[%c0_1, %c0_2, %c0_3] : memref<1x258x16xbf16, #tpu.memory_space<vmem>>, vector<1x224x16xbf16>
    %4 = vector.shape_cast %3 : vector<1x224x16xbf16> to vector<224x16xbf16>
    %c0_4 = arith.constant 0 : index
    %c0_5 = arith.constant 0 : index
    %5 = vector.load %arg2[%c0_4, %c0_5] : memref<144x128xbf16, #tpu.memory_space<vmem>>, vector<16x128xbf16>
    %cst = arith.constant dense<0.000000e+00> : vector<224x128xf32>
    %6 = tpu.matmul %4, %5, %cst {dimension_numbers = #tpu.dot_dimension_numbers<[1], [0], [0], [1], [0, 0, 1, 1], [], []>} : vector<224x16xbf16>, vector<16x128xbf16>, vector<224x128xf32> -> vector<224x128xf32>
    %7 = arith.addf %2, %6 : vector<224x128xf32>
    %c0_6 = arith.constant 0 : index
    %c1 = arith.constant 1 : index
    %c0_7 = arith.constant 0 : index
    %8 = vector.load %arg1[%c0_6, %c1, %c0_7] : memref<1x258x16xbf16, #tpu.memory_space<vmem>>, vector<1x224x16xbf16>
    %9 = vector.shape_cast %8 : vector<1x224x16xbf16> to vector<224x16xbf16>
    %c16 = arith.constant 16 : index
    %c0_8 = arith.constant 0 : index
    %10 = vector.load %arg2[%c16, %c0_8] : memref<144x128xbf16, #tpu.memory_space<vmem>>, vector<16x128xbf16>
    %cst_9 = arith.constant dense<0.000000e+00> : vector<224x128xf32>
    %11 = tpu.matmul %9, %10, %cst_9 {dimension_numbers = #tpu.dot_dimension_numbers<[1], [0], [0], [1], [0, 0, 1, 1], [], []>} : vector<224x16xbf16>, vector<16x128xbf16>, vector<224x128xf32> -> vector<224x128xf32>
    %12 = arith.addf %7, %11 : vector<224x128xf32>
    %c0_10 = arith.constant 0 : index
    %c2 = arith.constant 2 : index
    %c0_11 = arith.constant 0 : index
    %13 = vector.load %arg1[%c0_10, %c2, %c0_11] : memref<1x258x16xbf16, #tpu.memory_space<vmem>>, vector<1x224x16xbf16>
    %14 = vector.shape_cast %13 : vector<1x224x16xbf16> to vector<224x16xbf16>
    %c32 = arith.constant 32 : index
    %c0_12 = arith.constant 0 : index
    %15 = vector.load %arg2[%c32, %c0_12] : memref<144x128xbf16, #tpu.memory_space<vmem>>, vector<16x128xbf16>
    %cst_13 = arith.constant dense<0.000000e+00> : vector<224x128xf32>
    %16 = tpu.matmul %14, %15, %cst_13 {dimension_numbers = #tpu.dot_dimension_numbers<[1], [0], [0], [1], [0, 0, 1, 1], [], []>} : vector<224x16xbf16>, vector<16x128xbf16>, vector<224x128xf32> -> vector<224x128xf32>
    %17 = arith.addf %12, %16 : vector<224x128xf32>
    %c0_14 = arith.constant 0 : index
    %c16_15 = arith.constant 16 : index
    %c0_16 = arith.constant 0 : index
    %18 = vector.load %arg1[%c0_14, %c16_15, %c0_16] : memref<1x258x16xbf16, #tpu.memory_space<vmem>>, vector<1x224x16xbf16>
    %19 = vector.shape_cast %18 : vector<1x224x16xbf16> to vector<224x16xbf16>
    %c48 = arith.constant 48 : index
    %c0_17 = arith.constant 0 : index
    %20 = vector.load %arg2[%c48, %c0_17] : memref<144x128xbf16, #tpu.memory_space<vmem>>, vector<16x128xbf16>
    %cst_18 = arith.constant dense<0.000000e+00> : vector<224x128xf32>
    %21 = tpu.matmul %19, %20, %cst_18 {dimension_numbers = #tpu.dot_dimension_numbers<[1], [0], [0], [1], [0, 0, 1, 1], [], []>} : vector<224x16xbf16>, vector<16x128xbf16>, vector<224x128xf32> -> vector<224x128xf32>
    %22 = arith.addf %17, %21 : vector<224x128xf32>
    %c0_19 = arith.constant 0 : index
    %c17 = arith.constant 17 : index
    %c0_20 = arith.constant 0 : index
    %23 = vector.load %arg1[%c0_19, %c17, %c0_20] : memref<1x258x16xbf16, #tpu.memory_space<vmem>>, vector<1x224x16xbf16>
    %24 = vector.shape_cast %23 : vector<1x224x16xbf16> to vector<224x16xbf16>
    %c64 = arith.constant 64 : index
    %c0_21 = arith.constant 0 : index
    %25 = vector.load %arg2[%c64, %c0_21] : memref<144x128xbf16, #tpu.memory_space<vmem>>, vector<16x128xbf16>
    %cst_22 = arith.constant dense<0.000000e+00> : vector<224x128xf32>
    %26 = tpu.matmul %24, %25, %cst_22 {dimension_numbers = #tpu.dot_dimension_numbers<[1], [0], [0], [1], [0, 0, 1, 1], [], []>} : vector<224x16xbf16>, vector<16x128xbf16>, vector<224x128xf32> -> vector<224x128xf32>
    %27 = arith.addf %22, %26 : vector<224x128xf32>
    %c0_23 = arith.constant 0 : index
    %c18 = arith.constant 18 : index
    %c0_24 = arith.constant 0 : index
    %28 = vector.load %arg1[%c0_23, %c18, %c0_24] : memref<1x258x16xbf16, #tpu.memory_space<vmem>>, vector<1x224x16xbf16>
    %29 = vector.shape_cast %28 : vector<1x224x16xbf16> to vector<224x16xbf16>
    %c80 = arith.constant 80 : index
    %c0_25 = arith.constant 0 : index
    %30 = vector.load %arg2[%c80, %c0_25] : memref<144x128xbf16, #tpu.memory_space<vmem>>, vector<16x128xbf16>
    %cst_26 = arith.constant dense<0.000000e+00> : vector<224x128xf32>
    %31 = tpu.matmul %29, %30, %cst_26 {dimension_numbers = #tpu.dot_dimension_numbers<[1], [0], [0], [1], [0, 0, 1, 1], [], []>} : vector<224x16xbf16>, vector<16x128xbf16>, vector<224x128xf32> -> vector<224x128xf32>
    %32 = arith.addf %27, %31 : vector<224x128xf32>
    %c0_27 = arith.constant 0 : index
    %c32_28 = arith.constant 32 : index
    %c0_29 = arith.constant 0 : index
    %33 = vector.load %arg1[%c0_27, %c32_28, %c0_29] : memref<1x258x16xbf16, #tpu.memory_space<vmem>>, vector<1x224x16xbf16>
    %34 = vector.shape_cast %33 : vector<1x224x16xbf16> to vector<224x16xbf16>
    %c96 = arith.constant 96 : index
    %c0_30 = arith.constant 0 : index
    %35 = vector.load %arg2[%c96, %c0_30] : memref<144x128xbf16, #tpu.memory_space<vmem>>, vector<16x128xbf16>
    %cst_31 = arith.constant dense<0.000000e+00> : vector<224x128xf32>
    %36 = tpu.matmul %34, %35, %cst_31 {dimension_numbers = #tpu.dot_dimension_numbers<[1], [0], [0], [1], [0, 0, 1, 1], [], []>} : vector<224x16xbf16>, vector<16x128xbf16>, vector<224x128xf32> -> vector<224x128xf32>
    %37 = arith.addf %32, %36 : vector<224x128xf32>
    %c0_32 = arith.constant 0 : index
    %c33 = arith.constant 33 : index
    %c0_33 = arith.constant 0 : index
    %38 = vector.load %arg1[%c0_32, %c33, %c0_33] : memref<1x258x16xbf16, #tpu.memory_space<vmem>>, vector<1x224x16xbf16>
    %39 = vector.shape_cast %38 : vector<1x224x16xbf16> to vector<224x16xbf16>
    %c112 = arith.constant 112 : index
    %c0_34 = arith.constant 0 : index
    %40 = vector.load %arg2[%c112, %c0_34] : memref<144x128xbf16, #tpu.memory_space<vmem>>, vector<16x128xbf16>
    %cst_35 = arith.constant dense<0.000000e+00> : vector<224x128xf32>
    %41 = tpu.matmul %39, %40, %cst_35 {dimension_numbers = #tpu.dot_dimension_numbers<[1], [0], [0], [1], [0, 0, 1, 1], [], []>} : vector<224x16xbf16>, vector<16x128xbf16>, vector<224x128xf32> -> vector<224x128xf32>
    %42 = arith.addf %37, %41 : vector<224x128xf32>
    %c0_36 = arith.constant 0 : index
    %c34 = arith.constant 34 : index
    %c0_37 = arith.constant 0 : index
    %43 = vector.load %arg1[%c0_36, %c34, %c0_37] : memref<1x258x16xbf16, #tpu.memory_space<vmem>>, vector<1x224x16xbf16>
    %44 = vector.shape_cast %43 : vector<1x224x16xbf16> to vector<224x16xbf16>
    %c128 = arith.constant 128 : index
    %c0_38 = arith.constant 0 : index
    %45 = vector.load %arg2[%c128, %c0_38] : memref<144x128xbf16, #tpu.memory_space<vmem>>, vector<16x128xbf16>
    %cst_39 = arith.constant dense<0.000000e+00> : vector<224x128xf32>
    %46 = tpu.matmul %44, %45, %cst_39 {dimension_numbers = #tpu.dot_dimension_numbers<[1], [0], [0], [1], [0, 0, 1, 1], [], []>} : vector<224x16xbf16>, vector<16x128xbf16>, vector<224x128xf32> -> vector<224x128xf32>
    %47 = arith.addf %42, %46 : vector<224x128xf32>
    %48 = arith.truncf %47 : vector<224x128xf32> to vector<224x128xbf16>
    %49 = vector.shape_cast %48 : vector<224x128xbf16> to vector<1x224x128xbf16>
    %c0_40 = arith.constant 0 : index
    %c0_41 = arith.constant 0 : index
    %c0_42 = arith.constant 0 : index
    %50 = vector.load %arg4[%c0_40, %c0_41, %c0_42] : memref<1x224x128xbf16, #tpu.memory_space<vmem>>, vector<1x224x128xbf16>
    tpu.vector_store %arg4[%c0_40, %c0_41, %c0_42], %49 {strides = array<i32>} : memref<1x224x128xbf16, #tpu.memory_space<vmem>>, vector<1x224x128xbf16>,
    return
  }
  func.func @transform_0(%arg0: i32) -> (i32, i32, i32) {
    %c0_i32 = arith.constant 0 : i32
    %c0_i32_0 = arith.constant 0 : i32
    %c0_i32_1 = arith.constant 0 : i32
    return %arg0, %c0_i32, %c0_i32_0 : i32, i32, i32
  }
  func.func @transform_1(%arg0: i32) -> (i32, i32) {
    %c0_i32 = arith.constant 0 : i32
    %c0_i32_0 = arith.constant 0 : i32
    %c0_i32_1 = arith.constant 0 : i32
    return %c0_i32, %c0_i32_0 : i32, i32
  }
  func.func @transform_2(%arg0: i32) -> (i32, i32) {
    %c0_i32 = arith.constant 0 : i32
    %c0_i32_0 = arith.constant 0 : i32
    %c0_i32_1 = arith.constant 0 : i32
    return %c0_i32, %c0_i32_0 : i32, i32
  }
  func.func @transform_3(%arg0: i32) -> (i32, i32, i32) {
    %c0_i32 = arith.constant 0 : i32
    %c0_i32_0 = arith.constant 0 : i32
    %c0_i32_1 = arith.constant 0 : i32
    return %arg0, %c0_i32, %c0_i32_0 : i32, i32, i32
  }
}

</mosaic_0001>

<llo_original>
// kernel: qconv_forward.1
$region0: #{qconv_forward.1}
  #allocation0 [shape = 'u32[]', space=smem, size = 0x4, offset = 0x4, fixed_abs, tag = 'smem constant byte address 0x4 - core index']
  #allocation1 [shape = 'u32[72,128]{1,0:T(1,128)}', space=vmem, size = 0x9000, scoped, tag = 'internal scratch']
  %s0 = inlined_call_operand.vmem [shape: bf16[2,258,16], index: 0, kind: input, shape index: {}]
  %s1 = inlined_call_operand.vmem [shape: bf16[144,128], index: 1, kind: input, shape index: {}]
  %s2 = inlined_call_operand.vmem [shape: f32[1,128], index: 2, kind: input, shape index: {}]
  %s3 = inlined_call_operand.vmem [shape: bf16[2,224,128], index: 3, kind: output, shape index: {}]
  %s4 = sld [smem:[#allocation0]]
  $region45: #{qconv_forward.1} parent=0
    _
  %s6 = ssub.s32 1, %s4
  %s7 = scalar_select 0, %s6, %s4
  loop: start=0, step=1, limit=4
  $region2: #{qconv_forward.1} parent=0 // loop_pre_header
    _
  $region3: #{qconv_forward.1} parent=0 // loop_header
    %s9 = sphi 0, %s13
    %p10 = scmp.ge.s32.totalorder %s9, 4
    %s19 = sphi 0, %s21
    %s22 = sphi 0, %s19
    %s23 = sphi 0, %s22
    %s39 = sphi 0, %s23
    %s43 = sphi 0, %s43
    %s45 = sphi 0, %s43
    %s46 = sphi 0, %s45
    %s60 = sphi 0, %s46
    %s64 = sphi 0, %s64
    %s66 = sphi 0, %s64
    %s67 = sphi 0, %s66
    %s81 = sphi 0, %s67
    %s87 = sphi 0, %s89
    %s90 = sphi 0, %s87
    %s91 = sphi 0, %s90
    %s107 = sphi 0, %s91
  $region4: #{qconv_forward.1} parent=0 // loop_header_branch
    %12 = sbr.rel (%p10) target = $region8
  $region5: #{qconv_forward.1} parent=0 // loop_body
    %s14 = ssub.s32 %s9, 1
    %s15 = ssub.s32 %s9, 2
    %s16 = sadd.s32 %s9, 1
    %s17 = ssub.s32 %s9, %s16
    %p18 = scmp.eq.s32.totalorder %s17, 0
    %s20 = sadd.s32 %s19, 1
    %s21 = scalar_select %p18, %s19, %s20
    %p24 = pneg %p18
    %p25 = scmp.eq.s32.totalorder %s9, 1
    %p26 = por %p24, %p25
    %p27 = scmp.ne.s32.totalorder %s19, %s22
    %p28 = scmp.eq.s32.totalorder %s9, 0
    %p29 = por %p27, %p28
    %p30 = scmp.ne.s32.totalorder %s19, %s22
    %p31 = scmp.eq.s32.totalorder %s14, 1
    %p32 = por %p30, %p31
    %p33 = scmp.ne.s32.totalorder %s22, %s23
    %p34 = scmp.eq.s32.totalorder %s14, 0
    %p35 = por %p33, %p34
    %p36 = scmp.ne.s32.totalorder %s22, %s23
    %p37 = scmp.eq.s32.totalorder %s15, 1
    %p38 = por %p36, %p37
    %p40 = scmp.ne.s32.totalorder %s23, %s39
    %p41 = scmp.eq.s32.totalorder %s15, 0
    %p42 = por %p40, %p41
    %s44 = sadd.s32 %s43, 1
    %p47 = scmp.eq.s32.totalorder %s9, 1
    %p48 = scmp.ne.s32.totalorder %s43, %s45
    %p49 = scmp.eq.s32.totalorder %s9, 0
    %p50 = por %p48, %p49
    %p51 = scmp.ne.s32.totalorder %s43, %s45
    %p52 = scmp.eq.s32.totalorder %s14, 1
    %p53 = por %p51, %p52
    %p54 = scmp.ne.s32.totalorder %s45, %s46
    %p55 = scmp.eq.s32.totalorder %s14, 0
    %p56 = por %p54, %p55
    %p57 = scmp.ne.s32.totalorder %s45, %s46
    %p58 = scmp.eq.s32.totalorder %s15, 1
    %p59 = por %p57, %p58
    %p61 = scmp.ne.s32.totalorder %s46, %s60
    %p62 = scmp.eq.s32.totalorder %s15, 0
    %p63 = por %p61, %p62
    %s65 = sadd.s32 %s64, 1
    %p68 = scmp.eq.s32.totalorder %s9, 1
    %p69 = scmp.ne.s32.totalorder %s64, %s66
    %p70 = scmp.eq.s32.totalorder %s9, 0
    %p71 = por %p69, %p70
    %p72 = scmp.ne.s32.totalorder %s64, %s66
    %p73 = scmp.eq.s32.totalorder %s14, 1
    %p74 = por %p72, %p73
    %p75 = scmp.ne.s32.totalorder %s66, %s67
    %p76 = scmp.eq.s32.totalorder %s14, 0
    %p77 = por %p75, %p76
    %p78 = scmp.ne.s32.totalorder %s66, %s67
    %p79 = scmp.eq.s32.totalorder %s15, 1
    %p80 = por %p78, %p79
    %p82 = scmp.ne.s32.totalorder %s67, %s81
    %p83 = scmp.eq.s32.totalorder %s15, 0
    %p84 = por %p82, %p83
    %s85 = ssub.s32 %s9, %s16
    %p86 = scmp.eq.s32.totalorder %s85, 0
    %s88 = sadd.s32 %s87, 1
    %s89 = scalar_select %p86, %s87, %s88
    %p92 = pneg %p86
    %p93 = scmp.eq.s32.totalorder %s9, 1
    %p94 = por %p92, %p93
    %p95 = scmp.ne.s32.totalorder %s87, %s90
    %p96 = scmp.eq.s32.totalorder %s9, 0
    %p97 = por %p95, %p96
    %p98 = scmp.ne.s32.totalorder %s87, %s90
    %p99 = scmp.eq.s32.totalorder %s14, 1
    %p100 = por %p98, %p99
    %p101 = scmp.ne.s32.totalorder %s90, %s91
    %p102 = scmp.eq.s32.totalorder %s14, 0
    %p103 = por %p101, %p102
    %p104 = scmp.ne.s32.totalorder %s90, %s91
    %p105 = scmp.eq.s32.totalorder %s15, 1
    %p106 = por %p104, %p105
    %p108 = scmp.ne.s32.totalorder %s91, %s107
    %p109 = scmp.eq.s32.totalorder %s15, 0
    %p110 = por %p108, %p109
    %p111 = scmp.le.s32.totalorder 1, %s9
    %p112 = scmp.lt.s32.totalorder %s9, 3
    %p113 = pnand %p111, %p112
    %p114 = pneg %p113
    // Predicated region
    $region9: #{qconv_forward.1} parent=5 // pred_check
      _
    $region10: #{qconv_forward.1} parent=5 // pred_check_branch
      %116 = sbr.rel (%p113) target = $region12
    $region11: #{qconv_forward.1} parent=5 // pred_region
      %s117 = ssub.s32 %s9, 1
      // Predicated region
      $region13: #{qconv_forward.1} parent=11 // pred_check
        %p118 = pneg %p56
      $region14: #{qconv_forward.1} parent=11 // pred_check_branch
        %120 = sbr.rel (%p118) target = $region16
      $region15: #{qconv_forward.1} parent=11 // pred_region
        _
      $region16: #{qconv_forward.1} parent=11 // pred_fallthru
        _
      // Predicated region
      $region17: #{qconv_forward.1} parent=11 // pred_check
        %p121 = pneg %p77
      $region18: #{qconv_forward.1} parent=11 // pred_check_branch
        %123 = sbr.rel (%p121) target = $region20
      $region19: #{qconv_forward.1} parent=11 // pred_region
        _
      $region20: #{qconv_forward.1} parent=11 // pred_fallthru
        _
    $region12: #{qconv_forward.1} parent=5 // pred_fallthru
      _
    %p124 = scmp.lt.s32.totalorder %s9, 2
    // Predicated region
    $region21: #{qconv_forward.1} parent=5 // pred_check
      %p125 = pneg %p124
    $region22: #{qconv_forward.1} parent=5 // pred_check_branch
      %127 = sbr.rel (%p125) target = $region24
    $region23: #{qconv_forward.1} parent=5 // pred_region
      // Predicated region
      $region25: #{qconv_forward.1} parent=23 // pred_check
        %p128 = pneg %p29
      $region26: #{qconv_forward.1} parent=23 // pred_check_branch
        %130 = sbr.rel (%p128) target = $region28
      $region27: #{qconv_forward.1} parent=23 // pred_region
        %p131 = scmp.lt.s32.totalorder %s9, 1
        %s132 = scalar_select %p131, %s9, 1
        %s133 = smul.addr %s132, 33
        %s134 = smul.addr %s133, 4
        %s135 = scalar_lea.vmem %s0, %s134
      $region28: #{qconv_forward.1} parent=23 // pred_fallthru
        _
    $region24: #{qconv_forward.1} parent=5 // pred_fallthru
      _
    %p136 = scmp.le.s32.totalorder 1, %s9
    %p137 = scmp.lt.s32.totalorder %s9, 3
    %p138 = pnand %p136, %p137
    %p139 = pneg %p138
    // Predicated region
    $region29: #{qconv_forward.1} parent=5 // pred_check
      _
    $region30: #{qconv_forward.1} parent=5 // pred_check_branch
      %141 = sbr.rel (%p138) target = $region32
    $region31: #{qconv_forward.1} parent=5 // pred_region
      %s142 = ssub.s32 %s9, 1
      %p143 = scmp.lt.s32.totalorder %s14, 1
      %s144 = scalar_select %p143, %s14, 1
      %s145 = smul.addr %s144, 33
      %s146 = smul.addr %s145, 4
      %s147 = scalar_lea.vmem %s0, %s146
      %p148 = pneg %p35
      %p149 = pneg %p32
      %p150 = pneg %p56
      %p151 = pneg %p53
      %p152 = pneg %p77
      %p153 = pneg %p74
      %p154 = pneg %p103
      %p155 = pneg %p100
      %p156 = scmp.lt.s32.totalorder %s14, 1
      %s157 = scalar_select %p156, %s14, 1
      %s158 = smul.addr %s157, 28
      %s159 = smul.addr %s158, 4
      %s160 = scalar_lea.vmem %s3, %s159
      %p161 = scmp.lt.s32.totalorder %s14, 1
      %s162 = scalar_select %p161, %s14, 1
      %s163 = smul.addr %s162, 33
      %s164 = smul.addr %s163, 4
      %s165 = scalar_lea.vmem %s0, %s164
      %p166 = scmp.lt.s32.totalorder %s14, 1
      %s167 = scalar_select %p166, %s14, 1
      %s168 = smul.addr %s167, 28
      %s169 = smul.addr %s168, 4
      %s170 = scalar_lea.vmem %s3, %s169
      %v172 = vld [vmem:[%s2] sm:$0x1]
      %v174 = vperm.slane %v172, 0
      %v176 = vld [vmem:[%s165] sm:$0xf]
      %v177 = vld [vmem:[%s165 + $0x4] sm:$0xf]
      %v178 = vld [vmem:[%s165 + $0x8] sm:$0xf]
      %v179 = vld [vmem:[%s165 + $0xc] sm:$0xf]
      %v180 = vld [vmem:[%s165 + $0x10] sm:$0xf]
      %v181 = vld [vmem:[%s165 + $0x14] sm:$0xf]
      %v182 = vld [vmem:[%s165 + $0x18] sm:$0xf]
      %v183 = vld [vmem:[%s165 + $0x1c] sm:$0xf]
      %v184 = vld [vmem:[%s165 + $0x20] sm:$0xf]
      %v185 = vld [vmem:[%s165 + $0x24] sm:$0xf]
      %v186 = vld [vmem:[%s165 + $0x28] sm:$0xf]
      %v187 = vld [vmem:[%s165 + $0x2c] sm:$0xf]
      %v188 = vld [vmem:[%s165 + $0x30] sm:$0xf]
      %v189 = vld [vmem:[%s165 + $0x34] sm:$0xf]
      %v190 = vld [vmem:[%s165 + $0x38] sm:$0xf]
      %v191 = vld [vmem:[%s165 + $0x3c] sm:$0xf]
      %v192 = vld [vmem:[%s165 + $0x40] sm:$0xf]
      %v193 = vld [vmem:[%s165 + $0x44] sm:$0xf]
      %v194 = vld [vmem:[%s165 + $0x48] sm:$0xf]
      %v195 = vld [vmem:[%s165 + $0x4c] sm:$0xf]
      %v196 = vld [vmem:[%s165 + $0x50] sm:$0xf]
      %v197 = vld [vmem:[%s165 + $0x54] sm:$0xf]
      %v198 = vld [vmem:[%s165 + $0x58] sm:$0xf]
      %v199 = vld [vmem:[%s165 + $0x5c] sm:$0xf]
      %v200 = vld [vmem:[%s165 + $0x60] sm:$0xf]
      %v201 = vld [vmem:[%s165 + $0x64] sm:$0xf]
      %v202 = vld [vmem:[%s165 + $0x68] sm:$0xf]
      %v203 = vld [vmem:[%s165 + $0x6c] sm:$0xf]
      %v204 = vld [vmem:[%s1] sm:$0xf]
      %v205 = vld [vmem:[%s1 + $0x4] sm:$0xf]
      %v234 = vunpack.c.l.b16 %v176
      %v235 = vunpack.c.l.b16 %v177
      %v236 = vunpack.c.l.b16 %v178
      %v237 = vunpack.c.l.b16 %v179
      %v238 = vunpack.c.l.b16 %v180
      %v239 = vunpack.c.l.b16 %v181
      %v240 = vunpack.c.l.b16 %v182
      %v241 = vunpack.c.l.b16 %v183
      %v242 = vunpack.c.l.b16 %v184
      %v243 = vunpack.c.l.b16 %v185
      %v244 = vunpack.c.l.b16 %v186
      %v245 = vunpack.c.l.b16 %v187
      %v246 = vunpack.c.l.b16 %v188
      %v247 = vunpack.c.l.b16 %v189
      %v248 = vunpack.c.l.b16 %v190
      %v249 = vunpack.c.l.b16 %v191
      %v250 = vunpack.c.l.b16 %v192
      %v251 = vunpack.c.l.b16 %v193
      %v252 = vunpack.c.l.b16 %v194
      %v253 = vunpack.c.l.b16 %v195
      %v254 = vunpack.c.l.b16 %v196
      %v255 = vunpack.c.l.b16 %v197
      %v256 = vunpack.c.l.b16 %v198
      %v257 = vunpack.c.l.b16 %v199
      %v258 = vunpack.c.l.b16 %v200
      %v259 = vunpack.c.l.b16 %v201
      %v260 = vunpack.c.l.b16 %v202
      %v261 = vunpack.c.l.b16 %v203
      %v262 = vpack.c.b16 %v235, %v234
      %v263 = vpack.c.b16 %v237, %v236
      %v264 = vpack.c.b16 %v239, %v238
      %v265 = vpack.c.b16 %v241, %v240
      %v266 = vpack.c.b16 %v243, %v242
      %v267 = vpack.c.b16 %v245, %v244
      %v268 = vpack.c.b16 %v247, %v246
      %v269 = vpack.c.b16 %v249, %v248
      %v270 = vpack.c.b16 %v251, %v250
      %v271 = vpack.c.b16 %v253, %v252
      %v272 = vpack.c.b16 %v255, %v254
      %v273 = vpack.c.b16 %v257, %v256
      %v274 = vpack.c.b16 %v259, %v258
      %v275 = vpack.c.b16 %v261, %v260
      %v278 = vunpack.c.l.b16 %v204
      %v279 = vunpack.c.l.b16 %v205
      %v280 = vpack.c.b16 %v279, %v278
      %vm282 = vcmask 130048
      %v284 = vsel %vm282, %v262, 0
      %v287 = vsel %vm282, %v263, 0
      %v290 = vsel %vm282, %v264, 0
      %v293 = vsel %vm282, %v265, 0
      %v296 = vsel %vm282, %v266, 0
      %v299 = vsel %vm282, %v267, 0
      %v302 = vsel %vm282, %v268, 0
      %v305 = vsel %vm282, %v269, 0
      %v308 = vsel %vm282, %v270, 0
      %v311 = vsel %vm282, %v271, 0
      %v314 = vsel %vm282, %v272, 0
      %v317 = vsel %vm282, %v273, 0
      %v320 = vsel %vm282, %v274, 0
      %v323 = vsel %vm282, %v275, 0
      %325 = vmatpush.bf16.msra.mxu0 0
      %326 = vmatpush.bf16.msra.mxu0 0
      %327 = vmatpush.bf16.msra.mxu0 0
      %328 = vmatpush.bf16.msra.mxu0 0
      %329 = vmatpush.bf16.msra.mxu0 0
      %330 = vmatpush.bf16.msra.mxu0 0
      %331 = vmatpush.bf16.msra.mxu0 0
      %332 = vmatpush.bf16.msra.mxu0 %v280
      %333 = vmatmul.bf16.gmra.mxu0 %v284
      %v334 = vpop.f32.mrf.mxu0
      %v335 = vadd.f32 0.0, %v334
      %v336 = vpop.f32.mrf.mxu0
      %v337 = vadd.f32 0.0, %v336
      %338 = vmatmul.bf16.gmra.mxu0 %v287
      %v339 = vpop.f32.mrf.mxu0
      %v340 = vadd.f32 0.0, %v339
      %v341 = vpop.f32.mrf.mxu0
      %v342 = vadd.f32 0.0, %v341
      %343 = vmatmul.bf16.gmra.mxu0 %v290
      %v344 = vpop.f32.mrf.mxu0
      %v345 = vadd.f32 0.0, %v344
      %v346 = vpop.f32.mrf.mxu0
      %v347 = vadd.f32 0.0, %v346
      %348 = vmatmul.bf16.gmra.mxu0 %v293
      %v349 = vpop.f32.mrf.mxu0
      %v350 = vadd.f32 0.0, %v349
      %v351 = vpop.f32.mrf.mxu0
      %v352 = vadd.f32 0.0, %v351
      %353 = vmatmul.bf16.gmra.mxu0 %v296
      %v354 = vpop.f32.mrf.mxu0
      %v355 = vadd.f32 0.0, %v354
      %v356 = vpop.f32.mrf.mxu0
      %v357 = vadd.f32 0.0, %v356
      %358 = vmatmul.bf16.gmra.mxu0 %v299
      %v359 = vpop.f32.mrf.mxu0
      %v360 = vadd.f32 0.0, %v359
      %v361 = vpop.f32.mrf.mxu0
      %v362 = vadd.f32 0.0, %v361
      %363 = vmatmul.bf16.gmra.mxu0 %v302
      %v364 = vpop.f32.mrf.mxu0
      %v365 = vadd.f32 0.0, %v364
      %v366 = vpop.f32.mrf.mxu0
      %v367 = vadd.f32 0.0, %v366
      %368 = vmatmul.bf16.gmra.mxu0 %v305
      %v369 = vpop.f32.mrf.mxu0
      %v370 = vadd.f32 0.0, %v369
      %v371 = vpop.f32.mrf.mxu0
      %v372 = vadd.f32 0.0, %v371
      %373 = vmatmul.bf16.gmra.mxu0 %v308
      %v374 = vpop.f32.mrf.mxu0
      %v375 = vadd.f32 0.0, %v374
      %v376 = vpop.f32.mrf.mxu0
      %v377 = vadd.f32 0.0, %v376
      %378 = vmatmul.bf16.gmra.mxu0 %v311
      %v379 = vpop.f32.mrf.mxu0
      %v380 = vadd.f32 0.0, %v379
      %v381 = vpop.f32.mrf.mxu0
      %v382 = vadd.f32 0.0, %v381
      %383 = vmatmul.bf16.gmra.mxu0 %v314
      %v384 = vpop.f32.mrf.mxu0
      %v385 = vadd.f32 0.0, %v384
      %v386 = vpop.f32.mrf.mxu0
      %v387 = vadd.f32 0.0, %v386
      %388 = vmatmul.bf16.gmra.mxu0 %v317
      %v389 = vpop.f32.mrf.mxu0
      %v390 = vadd.f32 0.0, %v389
      %v391 = vpop.f32.mrf.mxu0
      %v392 = vadd.f32 0.0, %v391
      %393 = vmatmul.bf16.gmra.mxu0 %v320
      %v394 = vpop.f32.mrf.mxu0
      %v395 = vadd.f32 0.0, %v394
      %v396 = vpop.f32.mrf.mxu0
      %v397 = vadd.f32 0.0, %v396
      %398 = vmatmul.bf16.gmra.mxu0 %v323
      %v399 = vpop.f32.mrf.mxu0
      %v400 = vadd.f32 0.0, %v399
      %v401 = vpop.f32.mrf.mxu0
      %v402 = vadd.f32 0.0, %v401
      %403 = vdwg.mxu0
      %v404 = vadd.f32 %v174, %v335
      %v405 = vadd.f32 %v174, %v337
      %v406 = vadd.f32 %v174, %v340
      %v407 = vadd.f32 %v174, %v342
      %v408 = vadd.f32 %v174, %v345
      %v409 = vadd.f32 %v174, %v347
      %v410 = vadd.f32 %v174, %v350
      %v411 = vadd.f32 %v174, %v352
      %v412 = vadd.f32 %v174, %v355
      %v413 = vadd.f32 %v174, %v357
      %v414 = vadd.f32 %v174, %v360
      %v415 = vadd.f32 %v174, %v362
      %v416 = vadd.f32 %v174, %v365
      %v417 = vadd.f32 %v174, %v367
      %v418 = vadd.f32 %v174, %v370
      %v419 = vadd.f32 %v174, %v372
      %v420 = vadd.f32 %v174, %v375
      %v421 = vadd.f32 %v174, %v377
      %v422 = vadd.f32 %v174, %v380
      %v423 = vadd.f32 %v174, %v382
      %v424 = vadd.f32 %v174, %v385
      %v425 = vadd.f32 %v174, %v387
      %v426 = vadd.f32 %v174, %v390
      %v427 = vadd.f32 %v174, %v392
      %v428 = vadd.f32 %v174, %v395
      %v429 = vadd.f32 %v174, %v397
      %v430 = vadd.f32 %v174, %v400
      %v431 = vadd.f32 %v174, %v402
      %v432 = vld [vmem:[%s165] sm:$0xf]
      %v433 = vld [vmem:[%s165 + $0x4] sm:$0xf]
      %v434 = vld [vmem:[%s165 + $0x8] sm:$0xf]
      %v435 = vld [vmem:[%s165 + $0xc] sm:$0xf]
      %v436 = vld [vmem:[%s165 + $0x10] sm:$0xf]
      %v437 = vld [vmem:[%s165 + $0x14] sm:$0xf]
      %v438 = vld [vmem:[%s165 + $0x18] sm:$0xf]
      %v439 = vld [vmem:[%s165 + $0x1c] sm:$0xf]
      %v440 = vld [vmem:[%s165 + $0x20] sm:$0xf]
      %v441 = vld [vmem:[%s165 + $0x24] sm:$0xf]
      %v442 = vld [vmem:[%s165 + $0x28] sm:$0xf]
      %v443 = vld [vmem:[%s165 + $0x2c] sm:$0xf]
      %v444 = vld [vmem:[%s165 + $0x30] sm:$0xf]
      %v445 = vld [vmem:[%s165 + $0x34] sm:$0xf]
      %v446 = vld [vmem:[%s165 + $0x38] sm:$0xf]
      %v447 = vld [vmem:[%s165 + $0x3c] sm:$0xf]
      %v448 = vld [vmem:[%s165 + $0x40] sm:$0xf]
      %v449 = vld [vmem:[%s165 + $0x44] sm:$0xf]
      %v450 = vld [vmem:[%s165 + $0x48] sm:$0xf]
      %v451 = vld [vmem:[%s165 + $0x4c] sm:$0xf]
      %v452 = vld [vmem:[%s165 + $0x50] sm:$0xf]
      %v453 = vld [vmem:[%s165 + $0x54] sm:$0xf]
      %v454 = vld [vmem:[%s165 + $0x58] sm:$0xf]
      %v455 = vld [vmem:[%s165 + $0x5c] sm:$0xf]
      %v456 = vld [vmem:[%s165 + $0x60] sm:$0xf]
      %v457 = vld [vmem:[%s165 + $0x64] sm:$0xf]
      %v458 = vld [vmem:[%s165 + $0x68] sm:$0xf]
      %v459 = vld [vmem:[%s165 + $0x6c] sm:$0xf]
      %v460 = vld [vmem:[%s165 + $0x70] sm:$0x1]
      %v461 = vld [vmem:[%s1 + $0x8] sm:$0xf]
      %v462 = vld [vmem:[%s1 + $0xc] sm:$0xf]
      %v492 = vunpack.c.l.b16 %v432
      %v493 = vunpack.c.l.b16 %v433
      %v494 = vunpack.c.l.b16 %v434
      %v495 = vunpack.c.l.b16 %v435
      %v496 = vunpack.c.l.b16 %v436
      %v497 = vunpack.c.l.b16 %v437
      %v498 = vunpack.c.l.b16 %v438
      %v499 = vunpack.c.l.b16 %v439
      %v500 = vunpack.c.l.b16 %v440
      %v501 = vunpack.c.l.b16 %v441
      %v502 = vunpack.c.l.b16 %v442
      %v503 = vunpack.c.l.b16 %v443
      %v504 = vunpack.c.l.b16 %v444
      %v505 = vunpack.c.l.b16 %v445
      %v506 = vunpack.c.l.b16 %v446
      %v507 = vunpack.c.l.b16 %v447
      %v508 = vunpack.c.l.b16 %v448
      %v509 = vunpack.c.l.b16 %v449
      %v510 = vunpack.c.l.b16 %v450
      %v511 = vunpack.c.l.b16 %v451
      %v512 = vunpack.c.l.b16 %v452
      %v513 = vunpack.c.l.b16 %v453
      %v514 = vunpack.c.l.b16 %v454
      %v515 = vunpack.c.l.b16 %v455
      %v516 = vunpack.c.l.b16 %v456
      %v517 = vunpack.c.l.b16 %v457
      %v518 = vunpack.c.l.b16 %v458
      %v519 = vunpack.c.l.b16 %v459
      %v520 = vunpack.c.l.b16 %v460
      %v521 = vpack.c.b16 %v493, %v492
      %v522 = vpack.c.b16 %v495, %v494
      %v523 = vpack.c.b16 %v497, %v496
      %v524 = vpack.c.b16 %v499, %v498
      %v525 = vpack.c.b16 %v501, %v500
      %v526 = vpack.c.b16 %v503, %v502
      %v527 = vpack.c.b16 %v505, %v504
      %v528 = vpack.c.b16 %v507, %v506
      %v529 = vpack.c.b16 %v509, %v508
      %v530 = vpack.c.b16 %v511, %v510
      %v531 = vpack.c.b16 %v513, %v512
      %v532 = vpack.c.b16 %v515, %v514
      %v533 = vpack.c.b16 %v517, %v516
      %v534 = vpack.c.b16 %v519, %v518
      %v535 = vpack.c.b16 %v520, %v520
      %vm536 = vsmask.f32 7424
      %v538 = vshrl.u32 %v521, 16
      %v540 = vshll.u32 %v521, 16
      %v542 = vrot.slane %v540, 1
      %v543 = vor.u32 %v538, %v542
      %v545 = vshll.u32 %v522, 16
      %v547 = vrot.slane %v545, 1
      %v548 = vsel %vm536, %v543, %v547
      %v549 = vshrl.u32 %v522, 16
      %v551 = vor.u32 %v549, %v547
      %v553 = vshll.u32 %v523, 16
      %v555 = vrot.slane %v553, 1
      %v556 = vsel %vm536, %v551, %v555
      %v557 = vshrl.u32 %v523, 16
      %v559 = vor.u32 %v557, %v555
      %v561 = vshll.u32 %v524, 16
      %v563 = vrot.slane %v561, 1
      %v564 = vsel %vm536, %v559, %v563
      %v565 = vshrl.u32 %v524, 16
      %v567 = vor.u32 %v565, %v563
      %v569 = vshll.u32 %v525, 16
      %v571 = vrot.slane %v569, 1
      %v572 = vsel %vm536, %v567, %v571
      %v573 = vshrl.u32 %v525, 16
      %v575 = vor.u32 %v573, %v571
      %v577 = vshll.u32 %v526, 16
      %v579 = vrot.slane %v577, 1
      %v580 = vsel %vm536, %v575, %v579
      %v581 = vshrl.u32 %v526, 16
      %v583 = vor.u32 %v581, %v579
      %v585 = vshll.u32 %v527, 16
      %v587 = vrot.slane %v585, 1
      %v588 = vsel %vm536, %v583, %v587
      %v589 = vshrl.u32 %v527, 16
      %v591 = vor.u32 %v589, %v587
      %v593 = vshll.u32 %v528, 16
      %v595 = vrot.slane %v593, 1
      %v596 = vsel %vm536, %v591, %v595
      %v597 = vshrl.u32 %v528, 16
      %v599 = vor.u32 %v597, %v595
      %v601 = vshll.u32 %v529, 16
      %v603 = vrot.slane %v601, 1
      %v604 = vsel %vm536, %v599, %v603
      %v605 = vshrl.u32 %v529, 16
      %v607 = vor.u32 %v605, %v603
      %v609 = vshll.u32 %v530, 16
      %v611 = vrot.slane %v609, 1
      %v612 = vsel %vm536, %v607, %v611
      %v613 = vshrl.u32 %v530, 16
      %v615 = vor.u32 %v613, %v611
      %v617 = vshll.u32 %v531, 16
      %v619 = vrot.slane %v617, 1
      %v620 = vsel %vm536, %v615, %v619
      %v621 = vshrl.u32 %v531, 16
      %v623 = vor.u32 %v621, %v619
      %v625 = vshll.u32 %v532, 16
      %v627 = vrot.slane %v625, 1
      %v628 = vsel %vm536, %v623, %v627
      %v629 = vshrl.u32 %v532, 16
      %v631 = vor.u32 %v629, %v627
      %v633 = vshll.u32 %v533, 16
      %v635 = vrot.slane %v633, 1
      %v636 = vsel %vm536, %v631, %v635
      %v637 = vshrl.u32 %v533, 16
      %v639 = vor.u32 %v637, %v635
      %v641 = vshll.u32 %v534, 16
      %v643 = vrot.slane %v641, 1
      %v644 = vsel %vm536, %v639, %v643
      %v645 = vshrl.u32 %v534, 16
      %v647 = vor.u32 %v645, %v643
      %v649 = vshll.u32 %v535, 16
      %v651 = vrot.slane %v649, 1
      %v652 = vsel %vm536, %v647, %v651
      %v655 = vunpack.c.l.b16 %v461
      %v656 = vunpack.c.l.b16 %v462
      %v657 = vpack.c.b16 %v656, %v655
      %v660 = vsel %vm282, %v548, 0
      %v663 = vsel %vm282, %v556, 0
      %v666 = vsel %vm282, %v564, 0
      %v669 = vsel %vm282, %v572, 0
      %v672 = vsel %vm282, %v580, 0
      %v675 = vsel %vm282, %v588, 0
      %v678 = vsel %vm282, %v596, 0
      %v681 = vsel %vm282, %v604, 0
      %v684 = vsel %vm282, %v612, 0
      %v687 = vsel %vm282, %v620, 0
      %v690 = vsel %vm282, %v628, 0
      %v693 = vsel %vm282, %v636, 0
      %v696 = vsel %vm282, %v644, 0
      %v699 = vsel %vm282, %v652, 0
      %701 = vmatpush.bf16.msra.mxu0 0
      %702 = vmatpush.bf16.msra.mxu0 0
      %703 = vmatpush.bf16.msra.mxu0 0
      %704 = vmatpush.bf16.msra.mxu0 0
      %705 = vmatpush.bf16.msra.mxu0 0
      %706 = vmatpush.bf16.msra.mxu0 0
      %707 = vmatpush.bf16.msra.mxu0 0
      %708 = vmatpush.bf16.msra.mxu0 %v657
      %709 = vmatmul.bf16.gmra.mxu0 %v660
      %v710 = vpop.f32.mrf.mxu0
      %v711 = vadd.f32 0.0, %v710
      %v712 = vpop.f32.mrf.mxu0
      %v713 = vadd.f32 0.0, %v712
      %714 = vmatmul.bf16.gmra.mxu0 %v663
      %v715 = vpop.f32.mrf.mxu0
      %v716 = vadd.f32 0.0, %v715
      %v717 = vpop.f32.mrf.mxu0
      %v718 = vadd.f32 0.0, %v717
      %719 = vmatmul.bf16.gmra.mxu0 %v666
      %v720 = vpop.f32.mrf.mxu0
      %v721 = vadd.f32 0.0, %v720
      %v722 = vpop.f32.mrf.mxu0
      %v723 = vadd.f32 0.0, %v722
      %724 = vmatmul.bf16.gmra.mxu0 %v669
      %v725 = vpop.f32.mrf.mxu0
      %v726 = vadd.f32 0.0, %v725
      %v727 = vpop.f32.mrf.mxu0
      %v728 = vadd.f32 0.0, %v727
      %729 = vmatmul.bf16.gmra.mxu0 %v672
      %v730 = vpop.f32.mrf.mxu0
      %v731 = vadd.f32 0.0, %v730
      %v732 = vpop.f32.mrf.mxu0
      %v733 = vadd.f32 0.0, %v732
      %734 = vmatmul.bf16.gmra.mxu0 %v675
      %v735 = vpop.f32.mrf.mxu0
      %v736 = vadd.f32 0.0, %v735
      %v737 = vpop.f32.mrf.mxu0
      %v738 = vadd.f32 0.0, %v737
      %739 = vmatmul.bf16.gmra.mxu0 %v678
      %v740 = vpop.f32.mrf.mxu0
      %v741 = vadd.f32 0.0, %v740
      %v742 = vpop.f32.mrf.mxu0
      %v743 = vadd.f32 0.0, %v742
      %744 = vmatmul.bf16.gmra.mxu0 %v681
      %v745 = vpop.f32.mrf.mxu0
      %v746 = vadd.f32 0.0, %v745
      %v747 = vpop.f32.mrf.mxu0
      %v748 = vadd.f32 0.0, %v747
      %749 = vmatmul.bf16.gmra.mxu0 %v684
      %v750 = vpop.f32.mrf.mxu0
      %v751 = vadd.f32 0.0, %v750
      %v752 = vpop.f32.mrf.mxu0
      %v753 = vadd.f32 0.0, %v752
      %754 = vmatmul.bf16.gmra.mxu0 %v687
      %v755 = vpop.f32.mrf.mxu0
      %v756 = vadd.f32 0.0, %v755
      %v757 = vpop.f32.mrf.mxu0
      %v758 = vadd.f32 0.0, %v757
      %759 = vmatmul.bf16.gmra.mxu0 %v690
      %v760 = vpop.f32.mrf.mxu0
      %v761 = vadd.f32 0.0, %v760
      %v762 = vpop.f32.mrf.mxu0
      %v763 = vadd.f32 0.0, %v762
      %764 = vmatmul.bf16.gmra.mxu0 %v693
      %v765 = vpop.f32.mrf.mxu0
      %v766 = vadd.f32 0.0, %v765
      %v767 = vpop.f32.mrf.mxu0
      %v768 = vadd.f32 0.0, %v767
      %769 = vmatmul.bf16.gmra.mxu0 %v696
      %v770 = vpop.f32.mrf.mxu0
      %v771 = vadd.f32 0.0, %v770
      %v772 = vpop.f32.mrf.mxu0
      %v773 = vadd.f32 0.0, %v772
      %774 = vmatmul.bf16.gmra.mxu0 %v699
      %v775 = vpop.f32.mrf.mxu0
      %v776 = vadd.f32 0.0, %v775
      %v777 = vpop.f32.mrf.mxu0
      %v778 = vadd.f32 0.0, %v777
      %779 = vdwg.mxu0
      %v780 = vadd.f32 %v404, %v711
      %v781 = vadd.f32 %v405, %v713
      %v782 = vadd.f32 %v406, %v716
      %v783 = vadd.f32 %v407, %v718
      %v784 = vadd.f32 %v408, %v721
      %v785 = vadd.f32 %v409, %v723
      %v786 = vadd.f32 %v410, %v726
      %v787 = vadd.f32 %v411, %v728
      %v788 = vadd.f32 %v412, %v731
      %v789 = vadd.f32 %v413, %v733
      %v790 = vadd.f32 %v414, %v736
      %v791 = vadd.f32 %v415, %v738
      %v792 = vadd.f32 %v416, %v741
      %v793 = vadd.f32 %v417, %v743
      %v794 = vadd.f32 %v418, %v746
      %v795 = vadd.f32 %v419, %v748
      %v796 = vadd.f32 %v420, %v751
      %v797 = vadd.f32 %v421, %v753
      %v798 = vadd.f32 %v422, %v756
      %v799 = vadd.f32 %v423, %v758
      %v800 = vadd.f32 %v424, %v761
      %v801 = vadd.f32 %v425, %v763
      %v802 = vadd.f32 %v426, %v766
      %v803 = vadd.f32 %v427, %v768
      %v804 = vadd.f32 %v428, %v771
      %v805 = vadd.f32 %v429, %v773
      %v806 = vadd.f32 %v430, %v776
      %v807 = vadd.f32 %v431, %v778
      %v808 = vld [vmem:[%s165] sm:$0xe]
      %v809 = vld [vmem:[%s1 + $0x10] sm:$0xf]
      %v810 = vld [vmem:[%s1 + $0x14] sm:$0xf]
      %v812 = vunpack.c.l.b16 %v808
      %v813 = vpack.c.b16 %v493, %v812
      %vm814 = vcmask 1046528
      %v815 = vrot.slane %v813, 1
      %v816 = vrot.slane %v522, 1
      %v817 = vsel %vm814, %v815, %v816
      %v818 = vrot.slane %v523, 1
      %v819 = vsel %vm814, %v816, %v818
      %v820 = vrot.slane %v524, 1
      %v821 = vsel %vm814, %v818, %v820
      %v822 = vrot.slane %v525, 1
      %v823 = vsel %vm814, %v820, %v822
      %v824 = vrot.slane %v526, 1
      %v825 = vsel %vm814, %v822, %v824
      %v826 = vrot.slane %v527, 1
      %v827 = vsel %vm814, %v824, %v826
      %v828 = vrot.slane %v528, 1
      %v829 = vsel %vm814, %v826, %v828
      %v830 = vrot.slane %v529, 1
      %v831 = vsel %vm814, %v828, %v830
      %v832 = vrot.slane %v530, 1
      %v833 = vsel %vm814, %v830, %v832
      %v834 = vrot.slane %v531, 1
      %v835 = vsel %vm814, %v832, %v834
      %v836 = vrot.slane %v532, 1
      %v837 = vsel %vm814, %v834, %v836
      %v838 = vrot.slane %v533, 1
      %v839 = vsel %vm814, %v836, %v838
      %v840 = vrot.slane %v534, 1
      %v841 = vsel %vm814, %v838, %v840
      %v842 = vrot.slane %v535, 1
      %v843 = vsel %vm814, %v840, %v842
      %v846 = vunpack.c.l.b16 %v809
      %v847 = vunpack.c.l.b16 %v810
      %v848 = vpack.c.b16 %v847, %v846
      %v851 = vsel %vm282, %v817, 0
      %v854 = vsel %vm282, %v819, 0
      %v857 = vsel %vm282, %v821, 0
      %v860 = vsel %vm282, %v823, 0
      %v863 = vsel %vm282, %v825, 0
      %v866 = vsel %vm282, %v827, 0
      %v869 = vsel %vm282, %v829, 0
      %v872 = vsel %vm282, %v831, 0
      %v875 = vsel %vm282, %v833, 0
      %v878 = vsel %vm282, %v835, 0
      %v881 = vsel %vm282, %v837, 0
      %v884 = vsel %vm282, %v839, 0
      %v887 = vsel %vm282, %v841, 0
      %v890 = vsel %vm282, %v843, 0
      %892 = vmatpush.bf16.msra.mxu0 0
      %893 = vmatpush.bf16.msra.mxu0 0
      %894 = vmatpush.bf16.msra.mxu0 0
      %895 = vmatpush.bf16.msra.mxu0 0
      %896 = vmatpush.bf16.msra.mxu0 0
      %897 = vmatpush.bf16.msra.mxu0 0
      %898 = vmatpush.bf16.msra.mxu0 0
      %899 = vmatpush.bf16.msra.mxu0 %v848
      %900 = vmatmul.bf16.gmra.mxu0 %v851
      %v901 = vpop.f32.mrf.mxu0
      %v902 = vadd.f32 0.0, %v901
      %v903 = vpop.f32.mrf.mxu0
      %v904 = vadd.f32 0.0, %v903
      %905 = vmatmul.bf16.gmra.mxu0 %v854
      %v906 = vpop.f32.mrf.mxu0
      %v907 = vadd.f32 0.0, %v906
      %v908 = vpop.f32.mrf.mxu0
      %v909 = vadd.f32 0.0, %v908
      %910 = vmatmul.bf16.gmra.mxu0 %v857
      %v911 = vpop.f32.mrf.mxu0
      %v912 = vadd.f32 0.0, %v911
      %v913 = vpop.f32.mrf.mxu0
      %v914 = vadd.f32 0.0, %v913
      %915 = vmatmul.bf16.gmra.mxu0 %v860
      %v916 = vpop.f32.mrf.mxu0
      %v917 = vadd.f32 0.0, %v916
      %v918 = vpop.f32.mrf.mxu0
      %v919 = vadd.f32 0.0, %v918
      %920 = vmatmul.bf16.gmra.mxu0 %v863
      %v921 = vpop.f32.mrf.mxu0
      %v922 = vadd.f32 0.0, %v921
      %v923 = vpop.f32.mrf.mxu0
      %v924 = vadd.f32 0.0, %v923
      %925 = vmatmul.bf16.gmra.mxu0 %v866
      %v926 = vpop.f32.mrf.mxu0
      %v927 = vadd.f32 0.0, %v926
      %v928 = vpop.f32.mrf.mxu0
      %v929 = vadd.f32 0.0, %v928
      %930 = vmatmul.bf16.gmra.mxu0 %v869
      %v931 = vpop.f32.mrf.mxu0
      %v932 = vadd.f32 0.0, %v931
      %v933 = vpop.f32.mrf.mxu0
      %v934 = vadd.f32 0.0, %v933
      %935 = vmatmul.bf16.gmra.mxu0 %v872
      %v936 = vpop.f32.mrf.mxu0
      %v937 = vadd.f32 0.0, %v936
      %v938 = vpop.f32.mrf.mxu0
      %v939 = vadd.f32 0.0, %v938
      %940 = vmatmul.bf16.gmra.mxu0 %v875
      %v941 = vpop.f32.mrf.mxu0
      %v942 = vadd.f32 0.0, %v941
      %v943 = vpop.f32.mrf.mxu0
      %v944 = vadd.f32 0.0, %v943
      %945 = vmatmul.bf16.gmra.mxu0 %v878
      %v946 = vpop.f32.mrf.mxu0
      %v947 = vadd.f32 0.0, %v946
      %v948 = vpop.f32.mrf.mxu0
      %v949 = vadd.f32 0.0, %v948
      %950 = vmatmul.bf16.gmra.mxu0 %v881
      %v951 = vpop.f32.mrf.mxu0
      %v952 = vadd.f32 0.0, %v951
      %v953 = vpop.f32.mrf.mxu0
      %v954 = vadd.f32 0.0, %v953
      %955 = vmatmul.bf16.gmra.mxu0 %v884
      %v956 = vpop.f32.mrf.mxu0
      %v957 = vadd.f32 0.0, %v956
      %v958 = vpop.f32.mrf.mxu0
      %v959 = vadd.f32 0.0, %v958
      %960 = vmatmul.bf16.gmra.mxu0 %v887
      %v961 = vpop.f32.mrf.mxu0
      %v962 = vadd.f32 0.0, %v961
      %v963 = vpop.f32.mrf.mxu0
      %v964 = vadd.f32 0.0, %v963
      %965 = vmatmul.bf16.gmra.mxu0 %v890
      %v966 = vpop.f32.mrf.mxu0
      %v967 = vadd.f32 0.0, %v966
      %v968 = vpop.f32.mrf.mxu0
      %v969 = vadd.f32 0.0, %v968
      %970 = vdwg.mxu0
      %v971 = vadd.f32 %v780, %v902
      %v972 = vadd.f32 %v781, %v904
      %v973 = vadd.f32 %v782, %v907
      %v974 = vadd.f32 %v783, %v909
      %v975 = vadd.f32 %v784, %v912
      %v976 = vadd.f32 %v785, %v914
      %v977 = vadd.f32 %v786, %v917
      %v978 = vadd.f32 %v787, %v919
      %v979 = vadd.f32 %v788, %v922
      %v980 = vadd.f32 %v789, %v924
      %v981 = vadd.f32 %v790, %v927
      %v982 = vadd.f32 %v791, %v929
      %v983 = vadd.f32 %v792, %v932
      %v984 = vadd.f32 %v793, %v934
      %v985 = vadd.f32 %v794, %v937
      %v986 = vadd.f32 %v795, %v939
      %v987 = vadd.f32 %v796, %v942
      %v988 = vadd.f32 %v797, %v944
      %v989 = vadd.f32 %v798, %v947
      %v990 = vadd.f32 %v799, %v949
      %v991 = vadd.f32 %v800, %v952
      %v992 = vadd.f32 %v801, %v954
      %v993 = vadd.f32 %v802, %v957
      %v994 = vadd.f32 %v803, %v959
      %v995 = vadd.f32 %v804, %v962
      %v996 = vadd.f32 %v805, %v964
      %v997 = vadd.f32 %v806, %v967
      %v998 = vadd.f32 %v807, %v969
      %v999 = vld [vmem:[%s165 + $0x8] sm:$0xf]
      %v1000 = vld [vmem:[%s165 + $0xc] sm:$0xf]
      %v1001 = vld [vmem:[%s165 + $0x10] sm:$0xf]
      %v1002 = vld [vmem:[%s165 + $0x14] sm:$0xf]
      %v1003 = vld [vmem:[%s165 + $0x18] sm:$0xf]
      %v1004 = vld [vmem:[%s165 + $0x1c] sm:$0xf]
      %v1005 = vld [vmem:[%s165 + $0x20] sm:$0xf]
      %v1006 = vld [vmem:[%s165 + $0x24] sm:$0xf]
      %v1007 = vld [vmem:[%s165 + $0x28] sm:$0xf]
      %v1008 = vld [vmem:[%s165 + $0x2c] sm:$0xf]
      %v1009 = vld [vmem:[%s165 + $0x30] sm:$0xf]
      %v1010 = vld [vmem:[%s165 + $0x34] sm:$0xf]
      %v1011 = vld [vmem:[%s165 + $0x38] sm:$0xf]
      %v1012 = vld [vmem:[%s165 + $0x3c] sm:$0xf]
      %v1013 = vld [vmem:[%s165 + $0x40] sm:$0xf]
      %v1014 = vld [vmem:[%s165 + $0x44] sm:$0xf]
      %v1015 = vld [vmem:[%s165 + $0x48] sm:$0xf]
      %v1016 = vld [vmem:[%s165 + $0x4c] sm:$0xf]
      %v1017 = vld [vmem:[%s165 + $0x50] sm:$0xf]
      %v1018 = vld [vmem:[%s165 + $0x54] sm:$0xf]
      %v1019 = vld [vmem:[%s165 + $0x58] sm:$0xf]
      %v1020 = vld [vmem:[%s165 + $0x5c] sm:$0xf]
      %v1021 = vld [vmem:[%s165 + $0x60] sm:$0xf]
      %v1022 = vld [vmem:[%s165 + $0x64] sm:$0xf]
      %v1023 = vld [vmem:[%s165 + $0x68] sm:$0xf]
      %v1024 = vld [vmem:[%s165 + $0x6c] sm:$0xf]
      %v1025 = vld [vmem:[%s165 + $0x70] sm:$0xf]
      %v1026 = vld [vmem:[%s165 + $0x74] sm:$0xf]
      %v1027 = vld [vmem:[%s1 + $0x18] sm:$0xf]
      %v1028 = vld [vmem:[%s1 + $0x1c] sm:$0xf]
      %v1057 = vunpack.c.l.b16 %v999
      %v1058 = vunpack.c.l.b16 %v1000
      %v1059 = vunpack.c.l.b16 %v1001
      %v1060 = vunpack.c.l.b16 %v1002
      %v1061 = vunpack.c.l.b16 %v1003
      %v1062 = vunpack.c.l.b16 %v1004
      %v1063 = vunpack.c.l.b16 %v1005
      %v1064 = vunpack.c.l.b16 %v1006
      %v1065 = vunpack.c.l.b16 %v1007
      %v1066 = vunpack.c.l.b16 %v1008
      %v1067 = vunpack.c.l.b16 %v1009
      %v1068 = vunpack.c.l.b16 %v1010
      %v1069 = vunpack.c.l.b16 %v1011
      %v1070 = vunpack.c.l.b16 %v1012
      %v1071 = vunpack.c.l.b16 %v1013
      %v1072 = vunpack.c.l.b16 %v1014
      %v1073 = vunpack.c.l.b16 %v1015
      %v1074 = vunpack.c.l.b16 %v1016
      %v1075 = vunpack.c.l.b16 %v1017
      %v1076 = vunpack.c.l.b16 %v1018
      %v1077 = vunpack.c.l.b16 %v1019
      %v1078 = vunpack.c.l.b16 %v1020
      %v1079 = vunpack.c.l.b16 %v1021
      %v1080 = vunpack.c.l.b16 %v1022
      %v1081 = vunpack.c.l.b16 %v1023
      %v1082 = vunpack.c.l.b16 %v1024
      %v1083 = vunpack.c.l.b16 %v1025
      %v1084 = vunpack.c.l.b16 %v1026
      %v1085 = vpack.c.b16 %v1058, %v1057
      %v1086 = vpack.c.b16 %v1060, %v1059
      %v1087 = vpack.c.b16 %v1062, %v1061
      %v1088 = vpack.c.b16 %v1064, %v1063
      %v1089 = vpack.c.b16 %v1066, %v1065
      %v1090 = vpack.c.b16 %v1068, %v1067
      %v1091 = vpack.c.b16 %v1070, %v1069
      %v1092 = vpack.c.b16 %v1072, %v1071
      %v1093 = vpack.c.b16 %v1074, %v1073
      %v1094 = vpack.c.b16 %v1076, %v1075
      %v1095 = vpack.c.b16 %v1078, %v1077
      %v1096 = vpack.c.b16 %v1080, %v1079
      %v1097 = vpack.c.b16 %v1082, %v1081
      %v1098 = vpack.c.b16 %v1084, %v1083
      %v1101 = vunpack.c.l.b16 %v1027
      %v1102 = vunpack.c.l.b16 %v1028
      %v1103 = vpack.c.b16 %v1102, %v1101
      %v1106 = vsel %vm282, %v1085, 0
      %v1109 = vsel %vm282, %v1086, 0
      %v1112 = vsel %vm282, %v1087, 0
      %v1115 = vsel %vm282, %v1088, 0
      %v1118 = vsel %vm282, %v1089, 0
      %v1121 = vsel %vm282, %v1090, 0
      %v1124 = vsel %vm282, %v1091, 0
      %v1127 = vsel %vm282, %v1092, 0
      %v1130 = vsel %vm282, %v1093, 0
      %v1133 = vsel %vm282, %v1094, 0
      %v1136 = vsel %vm282, %v1095, 0
      %v1139 = vsel %vm282, %v1096, 0
      %v1142 = vsel %vm282, %v1097, 0
      %v1145 = vsel %vm282, %v1098, 0
      %1147 = vmatpush.bf16.msra.mxu0 0
      %1148 = vmatpush.bf16.msra.mxu0 0
      %1149 = vmatpush.bf16.msra.mxu0 0
      %1150 = vmatpush.bf16.msra.mxu0 0
      %1151 = vmatpush.bf16.msra.mxu0 0
      %1152 = vmatpush.bf16.msra.mxu0 0
      %1153 = vmatpush.bf16.msra.mxu0 0
      %1154 = vmatpush.bf16.msra.mxu0 %v1103
      %1155 = vmatmul.bf16.gmra.mxu0 %v1106
      %v1156 = vpop.f32.mrf.mxu0
      %v1157 = vadd.f32 0.0, %v1156
      %v1158 = vpop.f32.mrf.mxu0
      %v1159 = vadd.f32 0.0, %v1158
      %1160 = vmatmul.bf16.gmra.mxu0 %v1109
      %v1161 = vpop.f32.mrf.mxu0
      %v1162 = vadd.f32 0.0, %v1161
      %v1163 = vpop.f32.mrf.mxu0
      %v1164 = vadd.f32 0.0, %v1163
      %1165 = vmatmul.bf16.gmra.mxu0 %v1112
      %v1166 = vpop.f32.mrf.mxu0
      %v1167 = vadd.f32 0.0, %v1166
      %v1168 = vpop.f32.mrf.mxu0
      %v1169 = vadd.f32 0.0, %v1168
      %1170 = vmatmul.bf16.gmra.mxu0 %v1115
      %v1171 = vpop.f32.mrf.mxu0
      %v1172 = vadd.f32 0.0, %v1171
      %v1173 = vpop.f32.mrf.mxu0
      %v1174 = vadd.f32 0.0, %v1173
      %1175 = vmatmul.bf16.gmra.mxu0 %v1118
      %v1176 = vpop.f32.mrf.mxu0
      %v1177 = vadd.f32 0.0, %v1176
      %v1178 = vpop.f32.mrf.mxu0
      %v1179 = vadd.f32 0.0, %v1178
      %1180 = vmatmul.bf16.gmra.mxu0 %v1121
      %v1181 = vpop.f32.mrf.mxu0
      %v1182 = vadd.f32 0.0, %v1181
      %v1183 = vpop.f32.mrf.mxu0
      %v1184 = vadd.f32 0.0, %v1183
      %1185 = vmatmul.bf16.gmra.mxu0 %v1124
      %v1186 = vpop.f32.mrf.mxu0
      %v1187 = vadd.f32 0.0, %v1186
      %v1188 = vpop.f32.mrf.mxu0
      %v1189 = vadd.f32 0.0, %v1188
      %1190 = vmatmul.bf16.gmra.mxu0 %v1127
      %v1191 = vpop.f32.mrf.mxu0
      %v1192 = vadd.f32 0.0, %v1191
      %v1193 = vpop.f32.mrf.mxu0
      %v1194 = vadd.f32 0.0, %v1193
      %1195 = vmatmul.bf16.gmra.mxu0 %v1130
      %v1196 = vpop.f32.mrf.mxu0
      %v1197 = vadd.f32 0.0, %v1196
      %v1198 = vpop.f32.mrf.mxu0
      %v1199 = vadd.f32 0.0, %v1198
      %1200 = vmatmul.bf16.gmra.mxu0 %v1133
      %v1201 = vpop.f32.mrf.mxu0
      %v1202 = vadd.f32 0.0, %v1201
      %v1203 = vpop.f32.mrf.mxu0
      %v1204 = vadd.f32 0.0, %v1203
      %1205 = vmatmul.bf16.gmra.mxu0 %v1136
      %v1206 = vpop.f32.mrf.mxu0
      %v1207 = vadd.f32 0.0, %v1206
      %v1208 = vpop.f32.mrf.mxu0
      %v1209 = vadd.f32 0.0, %v1208
      %1210 = vmatmul.bf16.gmra.mxu0 %v1139
      %v1211 = vpop.f32.mrf.mxu0
      %v1212 = vadd.f32 0.0, %v1211
      %v1213 = vpop.f32.mrf.mxu0
      %v1214 = vadd.f32 0.0, %v1213
      %1215 = vmatmul.bf16.gmra.mxu0 %v1142
      %v1216 = vpop.f32.mrf.mxu0
      %v1217 = vadd.f32 0.0, %v1216
      %v1218 = vpop.f32.mrf.mxu0
      %v1219 = vadd.f32 0.0, %v1218
      %1220 = vmatmul.bf16.gmra.mxu0 %v1145
      %v1221 = vpop.f32.mrf.mxu0
      %v1222 = vadd.f32 0.0, %v1221
      %v1223 = vpop.f32.mrf.mxu0
      %v1224 = vadd.f32 0.0, %v1223
      %1225 = vdwg.mxu0
      %v1226 = vadd.f32 %v971, %v1157
      %v1227 = vadd.f32 %v972, %v1159
      %v1228 = vadd.f32 %v973, %v1162
      %v1229 = vadd.f32 %v974, %v1164
      %v1230 = vadd.f32 %v975, %v1167
      %v1231 = vadd.f32 %v976, %v1169
      %v1232 = vadd.f32 %v977, %v1172
      %v1233 = vadd.f32 %v978, %v1174
      %v1234 = vadd.f32 %v979, %v1177
      %v1235 = vadd.f32 %v980, %v1179
      %v1236 = vadd.f32 %v981, %v1182
      %v1237 = vadd.f32 %v982, %v1184
      %v1238 = vadd.f32 %v983, %v1187
      %v1239 = vadd.f32 %v984, %v1189
      %v1240 = vadd.f32 %v985, %v1192
      %v1241 = vadd.f32 %v986, %v1194
      %v1242 = vadd.f32 %v987, %v1197
      %v1243 = vadd.f32 %v988, %v1199
      %v1244 = vadd.f32 %v989, %v1202
      %v1245 = vadd.f32 %v990, %v1204
      %v1246 = vadd.f32 %v991, %v1207
      %v1247 = vadd.f32 %v992, %v1209
      %v1248 = vadd.f32 %v993, %v1212
      %v1249 = vadd.f32 %v994, %v1214
      %v1250 = vadd.f32 %v995, %v1217
      %v1251 = vadd.f32 %v996, %v1219
      %v1252 = vadd.f32 %v997, %v1222
      %v1253 = vadd.f32 %v998, %v1224
      %v1254 = vld [vmem:[%s165 + $0x8] sm:$0xf]
      %v1255 = vld [vmem:[%s165 + $0xc] sm:$0xf]
      %v1256 = vld [vmem:[%s165 + $0x10] sm:$0xf]
      %v1257 = vld [vmem:[%s165 + $0x14] sm:$0xf]
      %v1258 = vld [vmem:[%s165 + $0x18] sm:$0xf]
      %v1259 = vld [vmem:[%s165 + $0x1c] sm:$0xf]
      %v1260 = vld [vmem:[%s165 + $0x20] sm:$0xf]
      %v1261 = vld [vmem:[%s165 + $0x24] sm:$0xf]
      %v1262 = vld [vmem:[%s165 + $0x28] sm:$0xf]
      %v1263 = vld [vmem:[%s165 + $0x2c] sm:$0xf]
      %v1264 = vld [vmem:[%s165 + $0x30] sm:$0xf]
      %v1265 = vld [vmem:[%s165 + $0x34] sm:$0xf]
      %v1266 = vld [vmem:[%s165 + $0x38] sm:$0xf]
      %v1267 = vld [vmem:[%s165 + $0x3c] sm:$0xf]
      %v1268 = vld [vmem:[%s165 + $0x40] sm:$0xf]
      %v1269 = vld [vmem:[%s165 + $0x44] sm:$0xf]
      %v1270 = vld [vmem:[%s165 + $0x48] sm:$0xf]
      %v1271 = vld [vmem:[%s165 + $0x4c] sm:$0xf]
      %v1272 = vld [vmem:[%s165 + $0x50] sm:$0xf]
      %v1273 = vld [vmem:[%s165 + $0x54] sm:$0xf]
      %v1274 = vld [vmem:[%s165 + $0x58] sm:$0xf]
      %v1275 = vld [vmem:[%s165 + $0x5c] sm:$0xf]
      %v1276 = vld [vmem:[%s165 + $0x60] sm:$0xf]
      %v1277 = vld [vmem:[%s165 + $0x64] sm:$0xf]
      %v1278 = vld [vmem:[%s165 + $0x68] sm:$0xf]
      %v1279 = vld [vmem:[%s165 + $0x6c] sm:$0xf]
      %v1280 = vld [vmem:[%s165 + $0x70] sm:$0xf]
      %v1281 = vld [vmem:[%s165 + $0x74] sm:$0xf]
      %v1282 = vld [vmem:[%s165 + $0x78] sm:$0x1]
      %v1283 = vld [vmem:[%s1 + $0x20] sm:$0xf]
      %v1284 = vld [vmem:[%s1 + $0x24] sm:$0xf]
      %v1314 = vunpack.c.l.b16 %v1254
      %v1315 = vunpack.c.l.b16 %v1255
      %v1316 = vunpack.c.l.b16 %v1256
      %v1317 = vunpack.c.l.b16 %v1257
      %v1318 = vunpack.c.l.b16 %v1258
      %v1319 = vunpack.c.l.b16 %v1259
      %v1320 = vunpack.c.l.b16 %v1260
      %v1321 = vunpack.c.l.b16 %v1261
      %v1322 = vunpack.c.l.b16 %v1262
      %v1323 = vunpack.c.l.b16 %v1263
      %v1324 = vunpack.c.l.b16 %v1264
      %v1325 = vunpack.c.l.b16 %v1265
      %v1326 = vunpack.c.l.b16 %v1266
      %v1327 = vunpack.c.l.b16 %v1267
      %v1328 = vunpack.c.l.b16 %v1268
      %v1329 = vunpack.c.l.b16 %v1269
      %v1330 = vunpack.c.l.b16 %v1270
      %v1331 = vunpack.c.l.b16 %v1271
      %v1332 = vunpack.c.l.b16 %v1272
      %v1333 = vunpack.c.l.b16 %v1273
      %v1334 = vunpack.c.l.b16 %v1274
      %v1335 = vunpack.c.l.b16 %v1275
      %v1336 = vunpack.c.l.b16 %v1276
      %v1337 = vunpack.c.l.b16 %v1277
      %v1338 = vunpack.c.l.b16 %v1278
      %v1339 = vunpack.c.l.b16 %v1279
      %v1340 = vunpack.c.l.b16 %v1280
      %v1341 = vunpack.c.l.b16 %v1281
      %v1342 = vunpack.c.l.b16 %v1282
      %v1343 = vpack.c.b16 %v1315, %v1314
      %v1344 = vpack.c.b16 %v1317, %v1316
      %v1345 = vpack.c.b16 %v1319, %v1318
      %v1346 = vpack.c.b16 %v1321, %v1320
      %v1347 = vpack.c.b16 %v1323, %v1322
      %v1348 = vpack.c.b16 %v1325, %v1324
      %v1349 = vpack.c.b16 %v1327, %v1326
      %v1350 = vpack.c.b16 %v1329, %v1328
      %v1351 = vpack.c.b16 %v1331, %v1330
      %v1352 = vpack.c.b16 %v1333, %v1332
      %v1353 = vpack.c.b16 %v1335, %v1334
      %v1354 = vpack.c.b16 %v1337, %v1336
      %v1355 = vpack.c.b16 %v1339, %v1338
      %v1356 = vpack.c.b16 %v1341, %v1340
      %v1357 = vpack.c.b16 %v1342, %v1342
      %v1359 = vshrl.u32 %v1343, 16
      %v1361 = vshll.u32 %v1343, 16
      %v1363 = vrot.slane %v1361, 1
      %v1364 = vor.u32 %v1359, %v1363
      %v1366 = vshll.u32 %v1344, 16
      %v1368 = vrot.slane %v1366, 1
      %v1369 = vsel %vm536, %v1364, %v1368
      %v1370 = vshrl.u32 %v1344, 16
      %v1372 = vor.u32 %v1370, %v1368
      %v1374 = vshll.u32 %v1345, 16
      %v1376 = vrot.slane %v1374, 1
      %v1377 = vsel %vm536, %v1372, %v1376
      %v1378 = vshrl.u32 %v1345, 16
      %v1380 = vor.u32 %v1378, %v1376
      %v1382 = vshll.u32 %v1346, 16
      %v1384 = vrot.slane %v1382, 1
      %v1385 = vsel %vm536, %v1380, %v1384
      %v1386 = vshrl.u32 %v1346, 16
      %v1388 = vor.u32 %v1386, %v1384
      %v1390 = vshll.u32 %v1347, 16
      %v1392 = vrot.slane %v1390, 1
      %v1393 = vsel %vm536, %v1388, %v1392
      %v1394 = vshrl.u32 %v1347, 16
      %v1396 = vor.u32 %v1394, %v1392
      %v1398 = vshll.u32 %v1348, 16
      %v1400 = vrot.slane %v1398, 1
      %v1401 = vsel %vm536, %v1396, %v1400
      %v1402 = vshrl.u32 %v1348, 16
      %v1404 = vor.u32 %v1402, %v1400
      %v1406 = vshll.u32 %v1349, 16
      %v1408 = vrot.slane %v1406, 1
      %v1409 = vsel %vm536, %v1404, %v1408
      %v1410 = vshrl.u32 %v1349, 16
      %v1412 = vor.u32 %v1410, %v1408
      %v1414 = vshll.u32 %v1350, 16
      %v1416 = vrot.slane %v1414, 1
      %v1417 = vsel %vm536, %v1412, %v1416
      %v1418 = vshrl.u32 %v1350, 16
      %v1420 = vor.u32 %v1418, %v1416
      %v1422 = vshll.u32 %v1351, 16
      %v1424 = vrot.slane %v1422, 1
      %v1425 = vsel %vm536, %v1420, %v1424
      %v1426 = vshrl.u32 %v1351, 16
      %v1428 = vor.u32 %v1426, %v1424
      %v1430 = vshll.u32 %v1352, 16
      %v1432 = vrot.slane %v1430, 1
      %v1433 = vsel %vm536, %v1428, %v1432
      %v1434 = vshrl.u32 %v1352, 16
      %v1436 = vor.u32 %v1434, %v1432
      %v1438 = vshll.u32 %v1353, 16
      %v1440 = vrot.slane %v1438, 1
      %v1441 = vsel %vm536, %v1436, %v1440
      %v1442 = vshrl.u32 %v1353, 16
      %v1444 = vor.u32 %v1442, %v1440
      %v1446 = vshll.u32 %v1354, 16
      %v1448 = vrot.slane %v1446, 1
      %v1449 = vsel %vm536, %v1444, %v1448
      %v1450 = vshrl.u32 %v1354, 16
      %v1452 = vor.u32 %v1450, %v1448
      %v1454 = vshll.u32 %v1355, 16
      %v1456 = vrot.slane %v1454, 1
      %v1457 = vsel %vm536, %v1452, %v1456
      %v1458 = vshrl.u32 %v1355, 16
      %v1460 = vor.u32 %v1458, %v1456
      %v1462 = vshll.u32 %v1356, 16
      %v1464 = vrot.slane %v1462, 1
      %v1465 = vsel %vm536, %v1460, %v1464
      %v1466 = vshrl.u32 %v1356, 16
      %v1468 = vor.u32 %v1466, %v1464
      %v1470 = vshll.u32 %v1357, 16
      %v1472 = vrot.slane %v1470, 1
      %v1473 = vsel %vm536, %v1468, %v1472
      %v1476 = vunpack.c.l.b16 %v1283
      %v1477 = vunpack.c.l.b16 %v1284
      %v1478 = vpack.c.b16 %v1477, %v1476
      %v1481 = vsel %vm282, %v1369, 0
      %v1484 = vsel %vm282, %v1377, 0
      %v1487 = vsel %vm282, %v1385, 0
      %v1490 = vsel %vm282, %v1393, 0
      %v1493 = vsel %vm282, %v1401, 0
      %v1496 = vsel %vm282, %v1409, 0
      %v1499 = vsel %vm282, %v1417, 0
      %v1502 = vsel %vm282, %v1425, 0
      %v1505 = vsel %vm282, %v1433, 0
      %v1508 = vsel %vm282, %v1441, 0
      %v1511 = vsel %vm282, %v1449, 0
      %v1514 = vsel %vm282, %v1457, 0
      %v1517 = vsel %vm282, %v1465, 0
      %v1520 = vsel %vm282, %v1473, 0
      %1522 = vmatpush.bf16.msra.mxu0 0
      %1523 = vmatpush.bf16.msra.mxu0 0
      %1524 = vmatpush.bf16.msra.mxu0 0
      %1525 = vmatpush.bf16.msra.mxu0 0
      %1526 = vmatpush.bf16.msra.mxu0 0
      %1527 = vmatpush.bf16.msra.mxu0 0
      %1528 = vmatpush.bf16.msra.mxu0 0
      %1529 = vmatpush.bf16.msra.mxu0 %v1478
      %1530 = vmatmul.bf16.gmra.mxu0 %v1481
      %v1531 = vpop.f32.mrf.mxu0
      %v1532 = vadd.f32 0.0, %v1531
      %v1533 = vpop.f32.mrf.mxu0
      %v1534 = vadd.f32 0.0, %v1533
      %1535 = vmatmul.bf16.gmra.mxu0 %v1484
      %v1536 = vpop.f32.mrf.mxu0
      %v1537 = vadd.f32 0.0, %v1536
      %v1538 = vpop.f32.mrf.mxu0
      %v1539 = vadd.f32 0.0, %v1538
      %1540 = vmatmul.bf16.gmra.mxu0 %v1487
      %v1541 = vpop.f32.mrf.mxu0
      %v1542 = vadd.f32 0.0, %v1541
      %v1543 = vpop.f32.mrf.mxu0
      %v1544 = vadd.f32 0.0, %v1543
      %1545 = vmatmul.bf16.gmra.mxu0 %v1490
      %v1546 = vpop.f32.mrf.mxu0
      %v1547 = vadd.f32 0.0, %v1546
      %v1548 = vpop.f32.mrf.mxu0
      %v1549 = vadd.f32 0.0, %v1548
      %1550 = vmatmul.bf16.gmra.mxu0 %v1493
      %v1551 = vpop.f32.mrf.mxu0
      %v1552 = vadd.f32 0.0, %v1551
      %v1553 = vpop.f32.mrf.mxu0
      %v1554 = vadd.f32 0.0, %v1553
      %1555 = vmatmul.bf16.gmra.mxu0 %v1496
      %v1556 = vpop.f32.mrf.mxu0
      %v1557 = vadd.f32 0.0, %v1556
      %v1558 = vpop.f32.mrf.mxu0
      %v1559 = vadd.f32 0.0, %v1558
      %1560 = vmatmul.bf16.gmra.mxu0 %v1499
      %v1561 = vpop.f32.mrf.mxu0
      %v1562 = vadd.f32 0.0, %v1561
      %v1563 = vpop.f32.mrf.mxu0
      %v1564 = vadd.f32 0.0, %v1563
      %1565 = vmatmul.bf16.gmra.mxu0 %v1502
      %v1566 = vpop.f32.mrf.mxu0
      %v1567 = vadd.f32 0.0, %v1566
      %v1568 = vpop.f32.mrf.mxu0
      %v1569 = vadd.f32 0.0, %v1568
      %1570 = vmatmul.bf16.gmra.mxu0 %v1505
      %v1571 = vpop.f32.mrf.mxu0
      %v1572 = vadd.f32 0.0, %v1571
      %v1573 = vpop.f32.mrf.mxu0
      %v1574 = vadd.f32 0.0, %v1573
      %1575 = vmatmul.bf16.gmra.mxu0 %v1508
      %v1576 = vpop.f32.mrf.mxu0
      %v1577 = vadd.f32 0.0, %v1576
      %v1578 = vpop.f32.mrf.mxu0
      %v1579 = vadd.f32 0.0, %v1578
      %1580 = vmatmul.bf16.gmra.mxu0 %v1511
      %v1581 = vpop.f32.mrf.mxu0
      %v1582 = vadd.f32 0.0, %v1581
      %v1583 = vpop.f32.mrf.mxu0
      %v1584 = vadd.f32 0.0, %v1583
      %1585 = vmatmul.bf16.gmra.mxu0 %v1514
      %v1586 = vpop.f32.mrf.mxu0
      %v1587 = vadd.f32 0.0, %v1586
      %v1588 = vpop.f32.mrf.mxu0
      %v1589 = vadd.f32 0.0, %v1588
      %1590 = vmatmul.bf16.gmra.mxu0 %v1517
      %v1591 = vpop.f32.mrf.mxu0
      %v1592 = vadd.f32 0.0, %v1591
      %v1593 = vpop.f32.mrf.mxu0
      %v1594 = vadd.f32 0.0, %v1593
      %1595 = vmatmul.bf16.gmra.mxu0 %v1520
      %v1596 = vpop.f32.mrf.mxu0
      %v1597 = vadd.f32 0.0, %v1596
      %v1598 = vpop.f32.mrf.mxu0
      %v1599 = vadd.f32 0.0, %v1598
      %1600 = vdwg.mxu0
      %v1601 = vadd.f32 %v1226, %v1532
      %v1602 = vadd.f32 %v1227, %v1534
      %v1603 = vadd.f32 %v1228, %v1537
      %v1604 = vadd.f32 %v1229, %v1539
      %v1605 = vadd.f32 %v1230, %v1542
      %v1606 = vadd.f32 %v1231, %v1544
      %v1607 = vadd.f32 %v1232, %v1547
      %v1608 = vadd.f32 %v1233, %v1549
      %v1609 = vadd.f32 %v1234, %v1552
      %v1610 = vadd.f32 %v1235, %v1554
      %v1611 = vadd.f32 %v1236, %v1557
      %v1612 = vadd.f32 %v1237, %v1559
      %v1613 = vadd.f32 %v1238, %v1562
      %v1614 = vadd.f32 %v1239, %v1564
      %v1615 = vadd.f32 %v1240, %v1567
      %v1616 = vadd.f32 %v1241, %v1569
      %v1617 = vadd.f32 %v1242, %v1572
      %v1618 = vadd.f32 %v1243, %v1574
      %v1619 = vadd.f32 %v1244, %v1577
      %v1620 = vadd.f32 %v1245, %v1579
      %v1621 = vadd.f32 %v1246, %v1582
      %v1622 = vadd.f32 %v1247, %v1584
      %v1623 = vadd.f32 %v1248, %v1587
      %v1624 = vadd.f32 %v1249, %v1589
      %v1625 = vadd.f32 %v1250, %v1592
      %v1626 = vadd.f32 %v1251, %v1594
      %v1627 = vadd.f32 %v1252, %v1597
      %v1628 = vadd.f32 %v1253, %v1599
      %v1629 = vld [vmem:[%s165 + $0x8] sm:$0xe]
      %v1630 = vld [vmem:[%s1 + $0x28] sm:$0xf]
      %v1631 = vld [vmem:[%s1 + $0x2c] sm:$0xf]
      %v1633 = vunpack.c.l.b16 %v1629
      %v1634 = vpack.c.b16 %v1315, %v1633
      %v1635 = vrot.slane %v1634, 1
      %v1636 = vrot.slane %v1344, 1
      %v1637 = vsel %vm814, %v1635, %v1636
      %v1638 = vrot.slane %v1345, 1
      %v1639 = vsel %vm814, %v1636, %v1638
      %v1640 = vrot.slane %v1346, 1
      %v1641 = vsel %vm814, %v1638, %v1640
      %v1642 = vrot.slane %v1347, 1
      %v1643 = vsel %vm814, %v1640, %v1642
      %v1644 = vrot.slane %v1348, 1
      %v1645 = vsel %vm814, %v1642, %v1644
      %v1646 = vrot.slane %v1349, 1
      %v1647 = vsel %vm814, %v1644, %v1646
      %v1648 = vrot.slane %v1350, 1
      %v1649 = vsel %vm814, %v1646, %v1648
      %v1650 = vrot.slane %v1351, 1
      %v1651 = vsel %vm814, %v1648, %v1650
      %v1652 = vrot.slane %v1352, 1
      %v1653 = vsel %vm814, %v1650, %v1652
      %v1654 = vrot.slane %v1353, 1
      %v1655 = vsel %vm814, %v1652, %v1654
      %v1656 = vrot.slane %v1354, 1
      %v1657 = vsel %vm814, %v1654, %v1656
      %v1658 = vrot.slane %v1355, 1
      %v1659 = vsel %vm814, %v1656, %v1658
      %v1660 = vrot.slane %v1356, 1
      %v1661 = vsel %vm814, %v1658, %v1660
      %v1662 = vrot.slane %v1357, 1
      %v1663 = vsel %vm814, %v1660, %v1662
      %v1666 = vunpack.c.l.b16 %v1630
      %v1667 = vunpack.c.l.b16 %v1631
      %v1668 = vpack.c.b16 %v1667, %v1666
      %v1671 = vsel %vm282, %v1637, 0
      %v1674 = vsel %vm282, %v1639, 0
      %v1677 = vsel %vm282, %v1641, 0
      %v1680 = vsel %vm282, %v1643, 0
      %v1683 = vsel %vm282, %v1645, 0
      %v1686 = vsel %vm282, %v1647, 0
      %v1689 = vsel %vm282, %v1649, 0
      %v1692 = vsel %vm282, %v1651, 0
      %v1695 = vsel %vm282, %v1653, 0
      %v1698 = vsel %vm282, %v1655, 0
      %v1701 = vsel %vm282, %v1657, 0
      %v1704 = vsel %vm282, %v1659, 0
      %v1707 = vsel %vm282, %v1661, 0
      %v1710 = vsel %vm282, %v1663, 0
      %1712 = vmatpush.bf16.msra.mxu0 0
      %1713 = vmatpush.bf16.msra.mxu0 0
      %1714 = vmatpush.bf16.msra.mxu0 0
      %1715 = vmatpush.bf16.msra.mxu0 0
      %1716 = vmatpush.bf16.msra.mxu0 0
      %1717 = vmatpush.bf16.msra.mxu0 0
      %1718 = vmatpush.bf16.msra.mxu0 0
      %1719 = vmatpush.bf16.msra.mxu0 %v1668
      %1720 = vmatmul.bf16.gmra.mxu0 %v1671
      %v1721 = vpop.f32.mrf.mxu0
      %v1722 = vadd.f32 0.0, %v1721
      %v1723 = vpop.f32.mrf.mxu0
      %v1724 = vadd.f32 0.0, %v1723
      %1725 = vmatmul.bf16.gmra.mxu0 %v1674
      %v1726 = vpop.f32.mrf.mxu0
      %v1727 = vadd.f32 0.0, %v1726
      %v1728 = vpop.f32.mrf.mxu0
      %v1729 = vadd.f32 0.0, %v1728
      %1730 = vmatmul.bf16.gmra.mxu0 %v1677
      %v1731 = vpop.f32.mrf.mxu0
      %v1732 = vadd.f32 0.0, %v1731
      %v1733 = vpop.f32.mrf.mxu0
      %v1734 = vadd.f32 0.0, %v1733
      %1735 = vmatmul.bf16.gmra.mxu0 %v1680
      %v1736 = vpop.f32.mrf.mxu0
      %v1737 = vadd.f32 0.0, %v1736
      %v1738 = vpop.f32.mrf.mxu0
      %v1739 = vadd.f32 0.0, %v1738
      %1740 = vmatmul.bf16.gmra.mxu0 %v1683
      %v1741 = vpop.f32.mrf.mxu0
      %v1742 = vadd.f32 0.0, %v1741
      %v1743 = vpop.f32.mrf.mxu0
      %v1744 = vadd.f32 0.0, %v1743
      %1745 = vmatmul.bf16.gmra.mxu0 %v1686
      %v1746 = vpop.f32.mrf.mxu0
      %v1747 = vadd.f32 0.0, %v1746
      %v1748 = vpop.f32.mrf.mxu0
      %v1749 = vadd.f32 0.0, %v1748
      %1750 = vmatmul.bf16.gmra.mxu0 %v1689
      %v1751 = vpop.f32.mrf.mxu0
      %v1752 = vadd.f32 0.0, %v1751
      %v1753 = vpop.f32.mrf.mxu0
      %v1754 = vadd.f32 0.0, %v1753
      %1755 = vmatmul.bf16.gmra.mxu0 %v1692
      %v1756 = vpop.f32.mrf.mxu0
      %v1757 = vadd.f32 0.0, %v1756
      %v1758 = vpop.f32.mrf.mxu0
      %v1759 = vadd.f32 0.0, %v1758
      %1760 = vmatmul.bf16.gmra.mxu0 %v1695
      %v1761 = vpop.f32.mrf.mxu0
      %v1762 = vadd.f32 0.0, %v1761
      %v1763 = vpop.f32.mrf.mxu0
      %v1764 = vadd.f32 0.0, %v1763
      %1765 = vmatmul.bf16.gmra.mxu0 %v1698
      %v1766 = vpop.f32.mrf.mxu0
      %v1767 = vadd.f32 0.0, %v1766
      %v1768 = vpop.f32.mrf.mxu0
      %v1769 = vadd.f32 0.0, %v1768
      %1770 = vmatmul.bf16.gmra.mxu0 %v1701
      %v1771 = vpop.f32.mrf.mxu0
      %v1772 = vadd.f32 0.0, %v1771
      %v1773 = vpop.f32.mrf.mxu0
      %v1774 = vadd.f32 0.0, %v1773
      %1775 = vmatmul.bf16.gmra.mxu0 %v1704
      %v1776 = vpop.f32.mrf.mxu0
      %v1777 = vadd.f32 0.0, %v1776
      %v1778 = vpop.f32.mrf.mxu0
      %v1779 = vadd.f32 0.0, %v1778
      %1780 = vmatmul.bf16.gmra.mxu0 %v1707
      %v1781 = vpop.f32.mrf.mxu0
      %v1782 = vadd.f32 0.0, %v1781
      %v1783 = vpop.f32.mrf.mxu0
      %v1784 = vadd.f32 0.0, %v1783
      %1785 = vmatmul.bf16.gmra.mxu0 %v1710
      %v1786 = vpop.f32.mrf.mxu0
      %v1787 = vadd.f32 0.0, %v1786
      %v1788 = vpop.f32.mrf.mxu0
      %v1789 = vadd.f32 0.0, %v1788
      %1790 = vdwg.mxu0
      %v1791 = vadd.f32 %v1601, %v1722
      %v1792 = vadd.f32 %v1602, %v1724
      %v1793 = vadd.f32 %v1603, %v1727
      %v1794 = vadd.f32 %v1604, %v1729
      %v1795 = vadd.f32 %v1605, %v1732
      %v1796 = vadd.f32 %v1606, %v1734
      %v1797 = vadd.f32 %v1607, %v1737
      %v1798 = vadd.f32 %v1608, %v1739
      %v1799 = vadd.f32 %v1609, %v1742
      %v1800 = vadd.f32 %v1610, %v1744
      %v1801 = vadd.f32 %v1611, %v1747
      %v1802 = vadd.f32 %v1612, %v1749
      %v1803 = vadd.f32 %v1613, %v1752
      %v1804 = vadd.f32 %v1614, %v1754
      %v1805 = vadd.f32 %v1615, %v1757
      %v1806 = vadd.f32 %v1616, %v1759
      %v1807 = vadd.f32 %v1617, %v1762
      %v1808 = vadd.f32 %v1618, %v1764
      %v1809 = vadd.f32 %v1619, %v1767
      %v1810 = vadd.f32 %v1620, %v1769
      %v1811 = vadd.f32 %v1621, %v1772
      %v1812 = vadd.f32 %v1622, %v1774
      %v1813 = vadd.f32 %v1623, %v1777
      %v1814 = vadd.f32 %v1624, %v1779
      %v1815 = vadd.f32 %v1625, %v1782
      %v1816 = vadd.f32 %v1626, %v1784
      %v1817 = vadd.f32 %v1627, %v1787
      %v1818 = vadd.f32 %v1628, %v1789
      %v1819 = vld [vmem:[%s165 + $0x10] sm:$0xf]
      %v1820 = vld [vmem:[%s165 + $0x14] sm:$0xf]
      %v1821 = vld [vmem:[%s165 + $0x18] sm:$0xf]
      %v1822 = vld [vmem:[%s165 + $0x1c] sm:$0xf]
      %v1823 = vld [vmem:[%s165 + $0x20] sm:$0xf]
      %v1824 = vld [vmem:[%s165 + $0x24] sm:$0xf]
      %v1825 = vld [vmem:[%s165 + $0x28] sm:$0xf]
      %v1826 = vld [vmem:[%s165 + $0x2c] sm:$0xf]
      %v1827 = vld [vmem:[%s165 + $0x30] sm:$0xf]
      %v1828 = vld [vmem:[%s165 + $0x34] sm:$0xf]
      %v1829 = vld [vmem:[%s165 + $0x38] sm:$0xf]
      %v1830 = vld [vmem:[%s165 + $0x3c] sm:$0xf]
      %v1831 = vld [vmem:[%s165 + $0x40] sm:$0xf]
      %v1832 = vld [vmem:[%s165 + $0x44] sm:$0xf]
      %v1833 = vld [vmem:[%s165 + $0x48] sm:$0xf]
      %v1834 = vld [vmem:[%s165 + $0x4c] sm:$0xf]
      %v1835 = vld [vmem:[%s165 + $0x50] sm:$0xf]
      %v1836 = vld [vmem:[%s165 + $0x54] sm:$0xf]
      %v1837 = vld [vmem:[%s165 + $0x58] sm:$0xf]
      %v1838 = vld [vmem:[%s165 + $0x5c] sm:$0xf]
      %v1839 = vld [vmem:[%s165 + $0x60] sm:$0xf]
      %v1840 = vld [vmem:[%s165 + $0x64] sm:$0xf]
      %v1841 = vld [vmem:[%s165 + $0x68] sm:$0xf]
      %v1842 = vld [vmem:[%s165 + $0x6c] sm:$0xf]
      %v1843 = vld [vmem:[%s165 + $0x70] sm:$0xf]
      %v1844 = vld [vmem:[%s165 + $0x74] sm:$0xf]
      %v1845 = vld [vmem:[%s165 + $0x78] sm:$0xf]
      %v1846 = vld [vmem:[%s165 + $0x7c] sm:$0xf]
      %v1847 = vld [vmem:[%s1 + $0x30] sm:$0xf]
      %v1848 = vld [vmem:[%s1 + $0x34] sm:$0xf]
      %v1877 = vunpack.c.l.b16 %v1819
      %v1878 = vunpack.c.l.b16 %v1820
      %v1879 = vunpack.c.l.b16 %v1821
      %v1880 = vunpack.c.l.b16 %v1822
      %v1881 = vunpack.c.l.b16 %v1823
      %v1882 = vunpack.c.l.b16 %v1824
      %v1883 = vunpack.c.l.b16 %v1825
      %v1884 = vunpack.c.l.b16 %v1826
      %v1885 = vunpack.c.l.b16 %v1827
      %v1886 = vunpack.c.l.b16 %v1828
      %v1887 = vunpack.c.l.b16 %v1829
      %v1888 = vunpack.c.l.b16 %v1830
      %v1889 = vunpack.c.l.b16 %v1831
      %v1890 = vunpack.c.l.b16 %v1832
      %v1891 = vunpack.c.l.b16 %v1833
      %v1892 = vunpack.c.l.b16 %v1834
      %v1893 = vunpack.c.l.b16 %v1835
      %v1894 = vunpack.c.l.b16 %v1836
      %v1895 = vunpack.c.l.b16 %v1837
      %v1896 = vunpack.c.l.b16 %v1838
      %v1897 = vunpack.c.l.b16 %v1839
      %v1898 = vunpack.c.l.b16 %v1840
      %v1899 = vunpack.c.l.b16 %v1841
      %v1900 = vunpack.c.l.b16 %v1842
      %v1901 = vunpack.c.l.b16 %v1843
      %v1902 = vunpack.c.l.b16 %v1844
      %v1903 = vunpack.c.l.b16 %v1845
      %v1904 = vunpack.c.l.b16 %v1846
      %v1905 = vpack.c.b16 %v1878, %v1877
      %v1906 = vpack.c.b16 %v1880, %v1879
      %v1907 = vpack.c.b16 %v1882, %v1881
      %v1908 = vpack.c.b16 %v1884, %v1883
      %v1909 = vpack.c.b16 %v1886, %v1885
      %v1910 = vpack.c.b16 %v1888, %v1887
      %v1911 = vpack.c.b16 %v1890, %v1889
      %v1912 = vpack.c.b16 %v1892, %v1891
      %v1913 = vpack.c.b16 %v1894, %v1893
      %v1914 = vpack.c.b16 %v1896, %v1895
      %v1915 = vpack.c.b16 %v1898, %v1897
      %v1916 = vpack.c.b16 %v1900, %v1899
      %v1917 = vpack.c.b16 %v1902, %v1901
      %v1918 = vpack.c.b16 %v1904, %v1903
      %v1921 = vunpack.c.l.b16 %v1847
      %v1922 = vunpack.c.l.b16 %v1848
      %v1923 = vpack.c.b16 %v1922, %v1921
      %v1926 = vsel %vm282, %v1905, 0
      %v1929 = vsel %vm282, %v1906, 0
      %v1932 = vsel %vm282, %v1907, 0
      %v1935 = vsel %vm282, %v1908, 0
      %v1938 = vsel %vm282, %v1909, 0
      %v1941 = vsel %vm282, %v1910, 0
      %v1944 = vsel %vm282, %v1911, 0
      %v1947 = vsel %vm282, %v1912, 0
      %v1950 = vsel %vm282, %v1913, 0
      %v1953 = vsel %vm282, %v1914, 0
      %v1956 = vsel %vm282, %v1915, 0
      %v1959 = vsel %vm282, %v1916, 0
      %v1962 = vsel %vm282, %v1917, 0
      %v1965 = vsel %vm282, %v1918, 0
      %1967 = vmatpush.bf16.msra.mxu0 0
      %1968 = vmatpush.bf16.msra.mxu0 0
      %1969 = vmatpush.bf16.msra.mxu0 0
      %1970 = vmatpush.bf16.msra.mxu0 0
      %1971 = vmatpush.bf16.msra.mxu0 0
      %1972 = vmatpush.bf16.msra.mxu0 0
      %1973 = vmatpush.bf16.msra.mxu0 0
      %1974 = vmatpush.bf16.msra.mxu0 %v1923
      %1975 = vmatmul.bf16.gmra.mxu0 %v1926
      %v1976 = vpop.f32.mrf.mxu0
      %v1977 = vadd.f32 0.0, %v1976
      %v1978 = vpop.f32.mrf.mxu0
      %v1979 = vadd.f32 0.0, %v1978
      %1980 = vmatmul.bf16.gmra.mxu0 %v1929
      %v1981 = vpop.f32.mrf.mxu0
      %v1982 = vadd.f32 0.0, %v1981
      %v1983 = vpop.f32.mrf.mxu0
      %v1984 = vadd.f32 0.0, %v1983
      %1985 = vmatmul.bf16.gmra.mxu0 %v1932
      %v1986 = vpop.f32.mrf.mxu0
      %v1987 = vadd.f32 0.0, %v1986
      %v1988 = vpop.f32.mrf.mxu0
      %v1989 = vadd.f32 0.0, %v1988
      %1990 = vmatmul.bf16.gmra.mxu0 %v1935
      %v1991 = vpop.f32.mrf.mxu0
      %v1992 = vadd.f32 0.0, %v1991
      %v1993 = vpop.f32.mrf.mxu0
      %v1994 = vadd.f32 0.0, %v1993
      %1995 = vmatmul.bf16.gmra.mxu0 %v1938
      %v1996 = vpop.f32.mrf.mxu0
      %v1997 = vadd.f32 0.0, %v1996
      %v1998 = vpop.f32.mrf.mxu0
      %v1999 = vadd.f32 0.0, %v1998
      %2000 = vmatmul.bf16.gmra.mxu0 %v1941
      %v2001 = vpop.f32.mrf.mxu0
      %v2002 = vadd.f32 0.0, %v2001
      %v2003 = vpop.f32.mrf.mxu0
      %v2004 = vadd.f32 0.0, %v2003
      %2005 = vmatmul.bf16.gmra.mxu0 %v1944
      %v2006 = vpop.f32.mrf.mxu0
      %v2007 = vadd.f32 0.0, %v2006
      %v2008 = vpop.f32.mrf.mxu0
      %v2009 = vadd.f32 0.0, %v2008
      %2010 = vmatmul.bf16.gmra.mxu0 %v1947
      %v2011 = vpop.f32.mrf.mxu0
      %v2012 = vadd.f32 0.0, %v2011
      %v2013 = vpop.f32.mrf.mxu0
      %v2014 = vadd.f32 0.0, %v2013
      %2015 = vmatmul.bf16.gmra.mxu0 %v1950
      %v2016 = vpop.f32.mrf.mxu0
      %v2017 = vadd.f32 0.0, %v2016
      %v2018 = vpop.f32.mrf.mxu0
      %v2019 = vadd.f32 0.0, %v2018
      %2020 = vmatmul.bf16.gmra.mxu0 %v1953
      %v2021 = vpop.f32.mrf.mxu0
      %v2022 = vadd.f32 0.0, %v2021
      %v2023 = vpop.f32.mrf.mxu0
      %v2024 = vadd.f32 0.0, %v2023
      %2025 = vmatmul.bf16.gmra.mxu0 %v1956
      %v2026 = vpop.f32.mrf.mxu0
      %v2027 = vadd.f32 0.0, %v2026
      %v2028 = vpop.f32.mrf.mxu0
      %v2029 = vadd.f32 0.0, %v2028
      %2030 = vmatmul.bf16.gmra.mxu0 %v1959
      %v2031 = vpop.f32.mrf.mxu0
      %v2032 = vadd.f32 0.0, %v2031
      %v2033 = vpop.f32.mrf.mxu0
      %v2034 = vadd.f32 0.0, %v2033
      %2035 = vmatmul.bf16.gmra.mxu0 %v1962
      %v2036 = vpop.f32.mrf.mxu0
      %v2037 = vadd.f32 0.0, %v2036
      %v2038 = vpop.f32.mrf.mxu0
      %v2039 = vadd.f32 0.0, %v2038
      %2040 = vmatmul.bf16.gmra.mxu0 %v1965
      %v2041 = vpop.f32.mrf.mxu0
      %v2042 = vadd.f32 0.0, %v2041
      %v2043 = vpop.f32.mrf.mxu0
      %v2044 = vadd.f32 0.0, %v2043
      %2045 = vdwg.mxu0
      %v2046 = vadd.f32 %v1791, %v1977
      %v2047 = vadd.f32 %v1792, %v1979
      %v2048 = vadd.f32 %v1793, %v1982
      %v2049 = vadd.f32 %v1794, %v1984
      %v2050 = vadd.f32 %v1795, %v1987
      %v2051 = vadd.f32 %v1796, %v1989
      %v2052 = vadd.f32 %v1797, %v1992
      %v2053 = vadd.f32 %v1798, %v1994
      %v2054 = vadd.f32 %v1799, %v1997
      %v2055 = vadd.f32 %v1800, %v1999
      %v2056 = vadd.f32 %v1801, %v2002
      %v2057 = vadd.f32 %v1802, %v2004
      %v2058 = vadd.f32 %v1803, %v2007
      %v2059 = vadd.f32 %v1804, %v2009
      %v2060 = vadd.f32 %v1805, %v2012
      %v2061 = vadd.f32 %v1806, %v2014
      %v2062 = vadd.f32 %v1807, %v2017
      %v2063 = vadd.f32 %v1808, %v2019
      %v2064 = vadd.f32 %v1809, %v2022
      %v2065 = vadd.f32 %v1810, %v2024
      %v2066 = vadd.f32 %v1811, %v2027
      %v2067 = vadd.f32 %v1812, %v2029
      %v2068 = vadd.f32 %v1813, %v2032
      %v2069 = vadd.f32 %v1814, %v2034
      %v2070 = vadd.f32 %v1815, %v2037
      %v2071 = vadd.f32 %v1816, %v2039
      %v2072 = vadd.f32 %v1817, %v2042
      %v2073 = vadd.f32 %v1818, %v2044
      %v2074 = vld [vmem:[%s165 + $0x10] sm:$0xf]
      %v2075 = vld [vmem:[%s165 + $0x14] sm:$0xf]
      %v2076 = vld [vmem:[%s165 + $0x18] sm:$0xf]
      %v2077 = vld [vmem:[%s165 + $0x1c] sm:$0xf]
      %v2078 = vld [vmem:[%s165 + $0x20] sm:$0xf]
      %v2079 = vld [vmem:[%s165 + $0x24] sm:$0xf]
      %v2080 = vld [vmem:[%s165 + $0x28] sm:$0xf]
      %v2081 = vld [vmem:[%s165 + $0x2c] sm:$0xf]
      %v2082 = vld [vmem:[%s165 + $0x30] sm:$0xf]
      %v2083 = vld [vmem:[%s165 + $0x34] sm:$0xf]
      %v2084 = vld [vmem:[%s165 + $0x38] sm:$0xf]
      %v2085 = vld [vmem:[%s165 + $0x3c] sm:$0xf]
      %v2086 = vld [vmem:[%s165 + $0x40] sm:$0xf]
      %v2087 = vld [vmem:[%s165 + $0x44] sm:$0xf]
      %v2088 = vld [vmem:[%s165 + $0x48] sm:$0xf]
      %v2089 = vld [vmem:[%s165 + $0x4c] sm:$0xf]
      %v2090 = vld [vmem:[%s165 + $0x50] sm:$0xf]
      %v2091 = vld [vmem:[%s165 + $0x54] sm:$0xf]
      %v2092 = vld [vmem:[%s165 + $0x58] sm:$0xf]
      %v2093 = vld [vmem:[%s165 + $0x5c] sm:$0xf]
      %v2094 = vld [vmem:[%s165 + $0x60] sm:$0xf]
      %v2095 = vld [vmem:[%s165 + $0x64] sm:$0xf]
      %v2096 = vld [vmem:[%s165 + $0x68] sm:$0xf]
      %v2097 = vld [vmem:[%s165 + $0x6c] sm:$0xf]
      %v2098 = vld [vmem:[%s165 + $0x70] sm:$0xf]
      %v2099 = vld [vmem:[%s165 + $0x74] sm:$0xf]
      %v2100 = vld [vmem:[%s165 + $0x78] sm:$0xf]
      %v2101 = vld [vmem:[%s165 + $0x7c] sm:$0xf]
      %v2102 = vld [vmem:[%s165 + $0x80] sm:$0x1]
      %v2103 = vld [vmem:[%s1 + $0x38] sm:$0xf]
      %v2104 = vld [vmem:[%s1 + $0x3c] sm:$0xf]
      %v2134 = vunpack.c.l.b16 %v2074
      %v2135 = vunpack.c.l.b16 %v2075
      %v2136 = vunpack.c.l.b16 %v2076
      %v2137 = vunpack.c.l.b16 %v2077
      %v2138 = vunpack.c.l.b16 %v2078
      %v2139 = vunpack.c.l.b16 %v2079
      %v2140 = vunpack.c.l.b16 %v2080
      %v2141 = vunpack.c.l.b16 %v2081
      %v2142 = vunpack.c.l.b16 %v2082
      %v2143 = vunpack.c.l.b16 %v2083
      %v2144 = vunpack.c.l.b16 %v2084
      %v2145 = vunpack.c.l.b16 %v2085
      %v2146 = vunpack.c.l.b16 %v2086
      %v2147 = vunpack.c.l.b16 %v2087
      %v2148 = vunpack.c.l.b16 %v2088
      %v2149 = vunpack.c.l.b16 %v2089
      %v2150 = vunpack.c.l.b16 %v2090
      %v2151 = vunpack.c.l.b16 %v2091
      %v2152 = vunpack.c.l.b16 %v2092
      %v2153 = vunpack.c.l.b16 %v2093
      %v2154 = vunpack.c.l.b16 %v2094
      %v2155 = vunpack.c.l.b16 %v2095
      %v2156 = vunpack.c.l.b16 %v2096
      %v2157 = vunpack.c.l.b16 %v2097
      %v2158 = vunpack.c.l.b16 %v2098
      %v2159 = vunpack.c.l.b16 %v2099
      %v2160 = vunpack.c.l.b16 %v2100
      %v2161 = vunpack.c.l.b16 %v2101
      %v2162 = vunpack.c.l.b16 %v2102
      %v2163 = vpack.c.b16 %v2135, %v2134
      %v2164 = vpack.c.b16 %v2137, %v2136
      %v2165 = vpack.c.b16 %v2139, %v2138
      %v2166 = vpack.c.b16 %v2141, %v2140
      %v2167 = vpack.c.b16 %v2143, %v2142
      %v2168 = vpack.c.b16 %v2145, %v2144
      %v2169 = vpack.c.b16 %v2147, %v2146
      %v2170 = vpack.c.b16 %v2149, %v2148
      %v2171 = vpack.c.b16 %v2151, %v2150
      %v2172 = vpack.c.b16 %v2153, %v2152
      %v2173 = vpack.c.b16 %v2155, %v2154
      %v2174 = vpack.c.b16 %v2157, %v2156
      %v2175 = vpack.c.b16 %v2159, %v2158
      %v2176 = vpack.c.b16 %v2161, %v2160
      %v2177 = vpack.c.b16 %v2162, %v2162
      %v2179 = vshrl.u32 %v2163, 16
      %v2181 = vshll.u32 %v2163, 16
      %v2183 = vrot.slane %v2181, 1
      %v2184 = vor.u32 %v2179, %v2183
      %v2186 = vshll.u32 %v2164, 16
      %v2188 = vrot.slane %v2186, 1
      %v2189 = vsel %vm536, %v2184, %v2188
      %v2190 = vshrl.u32 %v2164, 16
      %v2192 = vor.u32 %v2190, %v2188
      %v2194 = vshll.u32 %v2165, 16
      %v2196 = vrot.slane %v2194, 1
      %v2197 = vsel %vm536, %v2192, %v2196
      %v2198 = vshrl.u32 %v2165, 16
      %v2200 = vor.u32 %v2198, %v2196
      %v2202 = vshll.u32 %v2166, 16
      %v2204 = vrot.slane %v2202, 1
      %v2205 = vsel %vm536, %v2200, %v2204
      %v2206 = vshrl.u32 %v2166, 16
      %v2208 = vor.u32 %v2206, %v2204
      %v2210 = vshll.u32 %v2167, 16
      %v2212 = vrot.slane %v2210, 1
      %v2213 = vsel %vm536, %v2208, %v2212
      %v2214 = vshrl.u32 %v2167, 16
      %v2216 = vor.u32 %v2214, %v2212
      %v2218 = vshll.u32 %v2168, 16
      %v2220 = vrot.slane %v2218, 1
      %v2221 = vsel %vm536, %v2216, %v2220
      %v2222 = vshrl.u32 %v2168, 16
      %v2224 = vor.u32 %v2222, %v2220
      %v2226 = vshll.u32 %v2169, 16
      %v2228 = vrot.slane %v2226, 1
      %v2229 = vsel %vm536, %v2224, %v2228
      %v2230 = vshrl.u32 %v2169, 16
      %v2232 = vor.u32 %v2230, %v2228
      %v2234 = vshll.u32 %v2170, 16
      %v2236 = vrot.slane %v2234, 1
      %v2237 = vsel %vm536, %v2232, %v2236
      %v2238 = vshrl.u32 %v2170, 16
      %v2240 = vor.u32 %v2238, %v2236
      %v2242 = vshll.u32 %v2171, 16
      %v2244 = vrot.slane %v2242, 1
      %v2245 = vsel %vm536, %v2240, %v2244
      %v2246 = vshrl.u32 %v2171, 16
      %v2248 = vor.u32 %v2246, %v2244
      %v2250 = vshll.u32 %v2172, 16
      %v2252 = vrot.slane %v2250, 1
      %v2253 = vsel %vm536, %v2248, %v2252
      %v2254 = vshrl.u32 %v2172, 16
      %v2256 = vor.u32 %v2254, %v2252
      %v2258 = vshll.u32 %v2173, 16
      %v2260 = vrot.slane %v2258, 1
      %v2261 = vsel %vm536, %v2256, %v2260
      %v2262 = vshrl.u32 %v2173, 16
      %v2264 = vor.u32 %v2262, %v2260
      %v2266 = vshll.u32 %v2174, 16
      %v2268 = vrot.slane %v2266, 1
      %v2269 = vsel %vm536, %v2264, %v2268
      %v2270 = vshrl.u32 %v2174, 16
      %v2272 = vor.u32 %v2270, %v2268
      %v2274 = vshll.u32 %v2175, 16
      %v2276 = vrot.slane %v2274, 1
      %v2277 = vsel %vm536, %v2272, %v2276
      %v2278 = vshrl.u32 %v2175, 16
      %v2280 = vor.u32 %v2278, %v2276
      %v2282 = vshll.u32 %v2176, 16
      %v2284 = vrot.slane %v2282, 1
      %v2285 = vsel %vm536, %v2280, %v2284
      %v2286 = vshrl.u32 %v2176, 16
      %v2288 = vor.u32 %v2286, %v2284
      %v2290 = vshll.u32 %v2177, 16
      %v2292 = vrot.slane %v2290, 1
      %v2293 = vsel %vm536, %v2288, %v2292
      %v2296 = vunpack.c.l.b16 %v2103
      %v2297 = vunpack.c.l.b16 %v2104
      %v2298 = vpack.c.b16 %v2297, %v2296
      %v2301 = vsel %vm282, %v2189, 0
      %v2304 = vsel %vm282, %v2197, 0
      %v2307 = vsel %vm282, %v2205, 0
      %v2310 = vsel %vm282, %v2213, 0
      %v2313 = vsel %vm282, %v2221, 0
      %v2316 = vsel %vm282, %v2229, 0
      %v2319 = vsel %vm282, %v2237, 0
      %v2322 = vsel %vm282, %v2245, 0
      %v2325 = vsel %vm282, %v2253, 0
      %v2328 = vsel %vm282, %v2261, 0
      %v2331 = vsel %vm282, %v2269, 0
      %v2334 = vsel %vm282, %v2277, 0
      %v2337 = vsel %vm282, %v2285, 0
      %v2340 = vsel %vm282, %v2293, 0
      %2342 = vmatpush.bf16.msra.mxu0 0
      %2343 = vmatpush.bf16.msra.mxu0 0
      %2344 = vmatpush.bf16.msra.mxu0 0
      %2345 = vmatpush.bf16.msra.mxu0 0
      %2346 = vmatpush.bf16.msra.mxu0 0
      %2347 = vmatpush.bf16.msra.mxu0 0
      %2348 = vmatpush.bf16.msra.mxu0 0
      %2349 = vmatpush.bf16.msra.mxu0 %v2298
      %2350 = vmatmul.bf16.gmra.mxu0 %v2301
      %v2351 = vpop.f32.mrf.mxu0
      %v2352 = vadd.f32 0.0, %v2351
      %v2353 = vpop.f32.mrf.mxu0
      %v2354 = vadd.f32 0.0, %v2353
      %2355 = vmatmul.bf16.gmra.mxu0 %v2304
      %v2356 = vpop.f32.mrf.mxu0
      %v2357 = vadd.f32 0.0, %v2356
      %v2358 = vpop.f32.mrf.mxu0
      %v2359 = vadd.f32 0.0, %v2358
      %2360 = vmatmul.bf16.gmra.mxu0 %v2307
      %v2361 = vpop.f32.mrf.mxu0
      %v2362 = vadd.f32 0.0, %v2361
      %v2363 = vpop.f32.mrf.mxu0
      %v2364 = vadd.f32 0.0, %v2363
      %2365 = vmatmul.bf16.gmra.mxu0 %v2310
      %v2366 = vpop.f32.mrf.mxu0
      %v2367 = vadd.f32 0.0, %v2366
      %v2368 = vpop.f32.mrf.mxu0
      %v2369 = vadd.f32 0.0, %v2368
      %2370 = vmatmul.bf16.gmra.mxu0 %v2313
      %v2371 = vpop.f32.mrf.mxu0
      %v2372 = vadd.f32 0.0, %v2371
      %v2373 = vpop.f32.mrf.mxu0
      %v2374 = vadd.f32 0.0, %v2373
      %2375 = vmatmul.bf16.gmra.mxu0 %v2316
      %v2376 = vpop.f32.mrf.mxu0
      %v2377 = vadd.f32 0.0, %v2376
      %v2378 = vpop.f32.mrf.mxu0
      %v2379 = vadd.f32 0.0, %v2378
      %2380 = vmatmul.bf16.gmra.mxu0 %v2319
      %v2381 = vpop.f32.mrf.mxu0
      %v2382 = vadd.f32 0.0, %v2381
      %v2383 = vpop.f32.mrf.mxu0
      %v2384 = vadd.f32 0.0, %v2383
      %2385 = vmatmul.bf16.gmra.mxu0 %v2322
      %v2386 = vpop.f32.mrf.mxu0
      %v2387 = vadd.f32 0.0, %v2386
      %v2388 = vpop.f32.mrf.mxu0
      %v2389 = vadd.f32 0.0, %v2388
      %2390 = vmatmul.bf16.gmra.mxu0 %v2325
      %v2391 = vpop.f32.mrf.mxu0
      %v2392 = vadd.f32 0.0, %v2391
      %v2393 = vpop.f32.mrf.mxu0
      %v2394 = vadd.f32 0.0, %v2393
      %2395 = vmatmul.bf16.gmra.mxu0 %v2328
      %v2396 = vpop.f32.mrf.mxu0
      %v2397 = vadd.f32 0.0, %v2396
      %v2398 = vpop.f32.mrf.mxu0
      %v2399 = vadd.f32 0.0, %v2398
      %2400 = vmatmul.bf16.gmra.mxu0 %v2331
      %v2401 = vpop.f32.mrf.mxu0
      %v2402 = vadd.f32 0.0, %v2401
      %v2403 = vpop.f32.mrf.mxu0
      %v2404 = vadd.f32 0.0, %v2403
      %2405 = vmatmul.bf16.gmra.mxu0 %v2334
      %v2406 = vpop.f32.mrf.mxu0
      %v2407 = vadd.f32 0.0, %v2406
      %v2408 = vpop.f32.mrf.mxu0
      %v2409 = vadd.f32 0.0, %v2408
      %2410 = vmatmul.bf16.gmra.mxu0 %v2337
      %v2411 = vpop.f32.mrf.mxu0
      %v2412 = vadd.f32 0.0, %v2411
      %v2413 = vpop.f32.mrf.mxu0
      %v2414 = vadd.f32 0.0, %v2413
      %2415 = vmatmul.bf16.gmra.mxu0 %v2340
      %v2416 = vpop.f32.mrf.mxu0
      %v2417 = vadd.f32 0.0, %v2416
      %v2418 = vpop.f32.mrf.mxu0
      %v2419 = vadd.f32 0.0, %v2418
      %2420 = vdwg.mxu0
      %v2421 = vadd.f32 %v2046, %v2352
      %v2422 = vadd.f32 %v2047, %v2354
      %v2423 = vadd.f32 %v2048, %v2357
      %v2424 = vadd.f32 %v2049, %v2359
      %v2425 = vadd.f32 %v2050, %v2362
      %v2426 = vadd.f32 %v2051, %v2364
      %v2427 = vadd.f32 %v2052, %v2367
      %v2428 = vadd.f32 %v2053, %v2369
      %v2429 = vadd.f32 %v2054, %v2372
      %v2430 = vadd.f32 %v2055, %v2374
      %v2431 = vadd.f32 %v2056, %v2377
      %v2432 = vadd.f32 %v2057, %v2379
      %v2433 = vadd.f32 %v2058, %v2382
      %v2434 = vadd.f32 %v2059, %v2384
      %v2435 = vadd.f32 %v2060, %v2387
      %v2436 = vadd.f32 %v2061, %v2389
      %v2437 = vadd.f32 %v2062, %v2392
      %v2438 = vadd.f32 %v2063, %v2394
      %v2439 = vadd.f32 %v2064, %v2397
      %v2440 = vadd.f32 %v2065, %v2399
      %v2441 = vadd.f32 %v2066, %v2402
      %v2442 = vadd.f32 %v2067, %v2404
      %v2443 = vadd.f32 %v2068, %v2407
      %v2444 = vadd.f32 %v2069, %v2409
      %v2445 = vadd.f32 %v2070, %v2412
      %v2446 = vadd.f32 %v2071, %v2414
      %v2447 = vadd.f32 %v2072, %v2417
      %v2448 = vadd.f32 %v2073, %v2419
      %v2449 = vld [vmem:[%s165 + $0x10] sm:$0xe]
      %v2450 = vld [vmem:[%s1 + $0x40] sm:$0xf]
      %v2451 = vld [vmem:[%s1 + $0x44] sm:$0xf]
      %v2453 = vunpack.c.l.b16 %v2449
      %v2454 = vpack.c.b16 %v2135, %v2453
      %v2455 = vrot.slane %v2454, 1
      %v2456 = vrot.slane %v2164, 1
      %v2457 = vsel %vm814, %v2455, %v2456
      %v2458 = vrot.slane %v2165, 1
      %v2459 = vsel %vm814, %v2456, %v2458
      %v2460 = vrot.slane %v2166, 1
      %v2461 = vsel %vm814, %v2458, %v2460
      %v2462 = vrot.slane %v2167, 1
      %v2463 = vsel %vm814, %v2460, %v2462
      %v2464 = vrot.slane %v2168, 1
      %v2465 = vsel %vm814, %v2462, %v2464
      %v2466 = vrot.slane %v2169, 1
      %v2467 = vsel %vm814, %v2464, %v2466
      %v2468 = vrot.slane %v2170, 1
      %v2469 = vsel %vm814, %v2466, %v2468
      %v2470 = vrot.slane %v2171, 1
      %v2471 = vsel %vm814, %v2468, %v2470
      %v2472 = vrot.slane %v2172, 1
      %v2473 = vsel %vm814, %v2470, %v2472
      %v2474 = vrot.slane %v2173, 1
      %v2475 = vsel %vm814, %v2472, %v2474
      %v2476 = vrot.slane %v2174, 1
      %v2477 = vsel %vm814, %v2474, %v2476
      %v2478 = vrot.slane %v2175, 1
      %v2479 = vsel %vm814, %v2476, %v2478
      %v2480 = vrot.slane %v2176, 1
      %v2481 = vsel %vm814, %v2478, %v2480
      %v2482 = vrot.slane %v2177, 1
      %v2483 = vsel %vm814, %v2480, %v2482
      %v2486 = vunpack.c.l.b16 %v2450
      %v2487 = vunpack.c.l.b16 %v2451
      %v2488 = vpack.c.b16 %v2487, %v2486
      %v2491 = vsel %vm282, %v2457, 0
      %v2494 = vsel %vm282, %v2459, 0
      %v2497 = vsel %vm282, %v2461, 0
      %v2500 = vsel %vm282, %v2463, 0
      %v2503 = vsel %vm282, %v2465, 0
      %v2506 = vsel %vm282, %v2467, 0
      %v2509 = vsel %vm282, %v2469, 0
      %v2512 = vsel %vm282, %v2471, 0
      %v2515 = vsel %vm282, %v2473, 0
      %v2518 = vsel %vm282, %v2475, 0
      %v2521 = vsel %vm282, %v2477, 0
      %v2524 = vsel %vm282, %v2479, 0
      %v2527 = vsel %vm282, %v2481, 0
      %v2530 = vsel %vm282, %v2483, 0
      %2532 = vmatpush.bf16.msra.mxu0 0
      %2533 = vmatpush.bf16.msra.mxu0 0
      %2534 = vmatpush.bf16.msra.mxu0 0
      %2535 = vmatpush.bf16.msra.mxu0 0
      %2536 = vmatpush.bf16.msra.mxu0 0
      %2537 = vmatpush.bf16.msra.mxu0 0
      %2538 = vmatpush.bf16.msra.mxu0 0
      %2539 = vmatpush.bf16.msra.mxu0 %v2488
      %2540 = vmatmul.bf16.gmra.mxu0 %v2491
      %v2541 = vpop.f32.mrf.mxu0
      %v2542 = vadd.f32 0.0, %v2541
      %v2543 = vpop.f32.mrf.mxu0
      %v2544 = vadd.f32 0.0, %v2543
      %2545 = vmatmul.bf16.gmra.mxu0 %v2494
      %v2546 = vpop.f32.mrf.mxu0
      %v2547 = vadd.f32 0.0, %v2546
      %v2548 = vpop.f32.mrf.mxu0
      %v2549 = vadd.f32 0.0, %v2548
      %2550 = vmatmul.bf16.gmra.mxu0 %v2497
      %v2551 = vpop.f32.mrf.mxu0
      %v2552 = vadd.f32 0.0, %v2551
      %v2553 = vpop.f32.mrf.mxu0
      %v2554 = vadd.f32 0.0, %v2553
      %2555 = vmatmul.bf16.gmra.mxu0 %v2500
      %v2556 = vpop.f32.mrf.mxu0
      %v2557 = vadd.f32 0.0, %v2556
      %v2558 = vpop.f32.mrf.mxu0
      %v2559 = vadd.f32 0.0, %v2558
      %2560 = vmatmul.bf16.gmra.mxu0 %v2503
      %v2561 = vpop.f32.mrf.mxu0
      %v2562 = vadd.f32 0.0, %v2561
      %v2563 = vpop.f32.mrf.mxu0
      %v2564 = vadd.f32 0.0, %v2563
      %2565 = vmatmul.bf16.gmra.mxu0 %v2506
      %v2566 = vpop.f32.mrf.mxu0
      %v2567 = vadd.f32 0.0, %v2566
      %v2568 = vpop.f32.mrf.mxu0
      %v2569 = vadd.f32 0.0, %v2568
      %2570 = vmatmul.bf16.gmra.mxu0 %v2509
      %v2571 = vpop.f32.mrf.mxu0
      %v2572 = vadd.f32 0.0, %v2571
      %v2573 = vpop.f32.mrf.mxu0
      %v2574 = vadd.f32 0.0, %v2573
      %2575 = vmatmul.bf16.gmra.mxu0 %v2512
      %v2576 = vpop.f32.mrf.mxu0
      %v2577 = vadd.f32 0.0, %v2576
      %v2578 = vpop.f32.mrf.mxu0
      %v2579 = vadd.f32 0.0, %v2578
      %2580 = vmatmul.bf16.gmra.mxu0 %v2515
      %v2581 = vpop.f32.mrf.mxu0
      %v2582 = vadd.f32 0.0, %v2581
      %v2583 = vpop.f32.mrf.mxu0
      %v2584 = vadd.f32 0.0, %v2583
      %2585 = vmatmul.bf16.gmra.mxu0 %v2518
      %v2586 = vpop.f32.mrf.mxu0
      %v2587 = vadd.f32 0.0, %v2586
      %v2588 = vpop.f32.mrf.mxu0
      %v2589 = vadd.f32 0.0, %v2588
      %2590 = vmatmul.bf16.gmra.mxu0 %v2521
      %v2591 = vpop.f32.mrf.mxu0
      %v2592 = vadd.f32 0.0, %v2591
      %v2593 = vpop.f32.mrf.mxu0
      %v2594 = vadd.f32 0.0, %v2593
      %2595 = vmatmul.bf16.gmra.mxu0 %v2524
      %v2596 = vpop.f32.mrf.mxu0
      %v2597 = vadd.f32 0.0, %v2596
      %v2598 = vpop.f32.mrf.mxu0
      %v2599 = vadd.f32 0.0, %v2598
      %2600 = vmatmul.bf16.gmra.mxu0 %v2527
      %v2601 = vpop.f32.mrf.mxu0
      %v2602 = vadd.f32 0.0, %v2601
      %v2603 = vpop.f32.mrf.mxu0
      %v2604 = vadd.f32 0.0, %v2603
      %2605 = vmatmul.bf16.gmra.mxu0 %v2530
      %v2606 = vpop.f32.mrf.mxu0
      %v2607 = vadd.f32 0.0, %v2606
      %v2608 = vpop.f32.mrf.mxu0
      %v2609 = vadd.f32 0.0, %v2608
      %2610 = vdwg.mxu0
      %v2611 = vadd.f32 %v2421, %v2542
      %v2612 = vadd.f32 %v2422, %v2544
      %v2613 = vadd.f32 %v2423, %v2547
      %v2614 = vadd.f32 %v2424, %v2549
      %v2615 = vadd.f32 %v2425, %v2552
      %v2616 = vadd.f32 %v2426, %v2554
      %v2617 = vadd.f32 %v2427, %v2557
      %v2618 = vadd.f32 %v2428, %v2559
      %v2619 = vadd.f32 %v2429, %v2562
      %v2620 = vadd.f32 %v2430, %v2564
      %v2621 = vadd.f32 %v2431, %v2567
      %v2622 = vadd.f32 %v2432, %v2569
      %v2623 = vadd.f32 %v2433, %v2572
      %v2624 = vadd.f32 %v2434, %v2574
      %v2625 = vadd.f32 %v2435, %v2577
      %v2626 = vadd.f32 %v2436, %v2579
      %v2627 = vadd.f32 %v2437, %v2582
      %v2628 = vadd.f32 %v2438, %v2584
      %v2629 = vadd.f32 %v2439, %v2587
      %v2630 = vadd.f32 %v2440, %v2589
      %v2631 = vadd.f32 %v2441, %v2592
      %v2632 = vadd.f32 %v2442, %v2594
      %v2633 = vadd.f32 %v2443, %v2597
      %v2634 = vadd.f32 %v2444, %v2599
      %v2635 = vadd.f32 %v2445, %v2602
      %v2636 = vadd.f32 %v2446, %v2604
      %v2637 = vadd.f32 %v2447, %v2607
      %v2638 = vadd.f32 %v2448, %v2609
      %v2639 = vpack.c.bf16 %v2611, %v2611
      %v2640 = vpack.c.bf16 %v2612, %v2612
      %v2641 = vpack.c.bf16 %v2613, %v2613
      %v2642 = vpack.c.bf16 %v2614, %v2614
      %v2643 = vpack.c.bf16 %v2615, %v2615
      %v2644 = vpack.c.bf16 %v2616, %v2616
      %v2645 = vpack.c.bf16 %v2617, %v2617
      %v2646 = vpack.c.bf16 %v2618, %v2618
      %v2647 = vpack.c.bf16 %v2619, %v2619
      %v2648 = vpack.c.bf16 %v2620, %v2620
      %v2649 = vpack.c.bf16 %v2621, %v2621
      %v2650 = vpack.c.bf16 %v2622, %v2622
      %v2651 = vpack.c.bf16 %v2623, %v2623
      %v2652 = vpack.c.bf16 %v2624, %v2624
      %v2653 = vpack.c.bf16 %v2625, %v2625
      %v2654 = vpack.c.bf16 %v2626, %v2626
      %v2655 = vpack.c.bf16 %v2627, %v2627
      %v2656 = vpack.c.bf16 %v2628, %v2628
      %v2657 = vpack.c.bf16 %v2629, %v2629
      %v2658 = vpack.c.bf16 %v2630, %v2630
      %v2659 = vpack.c.bf16 %v2631, %v2631
      %v2660 = vpack.c.bf16 %v2632, %v2632
      %v2661 = vpack.c.bf16 %v2633, %v2633
      %v2662 = vpack.c.bf16 %v2634, %v2634
      %v2663 = vpack.c.bf16 %v2635, %v2635
      %v2664 = vpack.c.bf16 %v2636, %v2636
      %v2665 = vpack.c.bf16 %v2637, %v2637
      %v2666 = vpack.c.bf16 %v2638, %v2638
      %2667 = vst [vmem:[%s170] sm:$0xf] %v2639
      %2668 = vst [vmem:[%s170 + $0x4] sm:$0xf] %v2640
      %2669 = vst [vmem:[%s170 + $0x8] sm:$0xf] %v2641
      %2670 = vst [vmem:[%s170 + $0xc] sm:$0xf] %v2642
      %2671 = vst [vmem:[%s170 + $0x10] sm:$0xf] %v2643
      %2672 = vst [vmem:[%s170 + $0x14] sm:$0xf] %v2644
      %2673 = vst [vmem:[%s170 + $0x18] sm:$0xf] %v2645
      %2674 = vst [vmem:[%s170 + $0x1c] sm:$0xf] %v2646
      %2675 = vst [vmem:[%s170 + $0x20] sm:$0xf] %v2647
      %2676 = vst [vmem:[%s170 + $0x24] sm:$0xf] %v2648
      %2677 = vst [vmem:[%s170 + $0x28] sm:$0xf] %v2649
      %2678 = vst [vmem:[%s170 + $0x2c] sm:$0xf] %v2650
      %2679 = vst [vmem:[%s170 + $0x30] sm:$0xf] %v2651
      %2680 = vst [vmem:[%s170 + $0x34] sm:$0xf] %v2652
      %2681 = vst [vmem:[%s170 + $0x38] sm:$0xf] %v2653
      %2682 = vst [vmem:[%s170 + $0x3c] sm:$0xf] %v2654
      %2683 = vst [vmem:[%s170 + $0x40] sm:$0xf] %v2655
      %2684 = vst [vmem:[%s170 + $0x44] sm:$0xf] %v2656
      %2685 = vst [vmem:[%s170 + $0x48] sm:$0xf] %v2657
      %2686 = vst [vmem:[%s170 + $0x4c] sm:$0xf] %v2658
      %2687 = vst [vmem:[%s170 + $0x50] sm:$0xf] %v2659
      %2688 = vst [vmem:[%s170 + $0x54] sm:$0xf] %v2660
      %2689 = vst [vmem:[%s170 + $0x58] sm:$0xf] %v2661
      %2690 = vst [vmem:[%s170 + $0x5c] sm:$0xf] %v2662
      %2691 = vst [vmem:[%s170 + $0x60] sm:$0xf] %v2663
      %2692 = vst [vmem:[%s170 + $0x64] sm:$0xf] %v2664
      %2693 = vst [vmem:[%s170 + $0x68] sm:$0xf] %v2665
      %2694 = vst [vmem:[%s170 + $0x6c] sm:$0xf] %v2666
      %p2695 = scmp.lt.s32.totalorder %s14, 1
      %s2696 = scalar_select %p2695, %s14, 1
      %s2697 = smul.addr %s2696, 28
      %s2698 = smul.addr %s2697, 4
      %s2699 = scalar_lea.vmem %s3, %s2698
      // Predicated region
      $region33: #{qconv_forward.1} parent=31 // pred_check
        %p2700 = pneg %p100
      $region34: #{qconv_forward.1} parent=31 // pred_check_branch
        %2702 = sbr.rel (%p2700) target = $region36
      $region35: #{qconv_forward.1} parent=31 // pred_region
        _
      $region36: #{qconv_forward.1} parent=31 // pred_fallthru
        _
    $region32: #{qconv_forward.1} parent=5 // pred_fallthru
      _
    %p2703 = scmp.le.s32.totalorder 2, %s9
    // Predicated region
    $region37: #{qconv_forward.1} parent=5 // pred_check
      %p2704 = pneg %p2703
    $region38: #{qconv_forward.1} parent=5 // pred_check_branch
      %2706 = sbr.rel (%p2704) target = $region40
    $region39: #{qconv_forward.1} parent=5 // pred_region
      %s2707 = ssub.s32 %s9, 2
      // Predicated region
      $region41: #{qconv_forward.1} parent=39 // pred_check
        %p2708 = pneg %p106
      $region42: #{qconv_forward.1} parent=39 // pred_check_branch
        %2710 = sbr.rel (%p2708) target = $region44
      $region43: #{qconv_forward.1} parent=39 // pred_region
        %p2711 = scmp.lt.s32.totalorder %s15, 1
        %s2712 = scalar_select %p2711, %s15, 1
        %s2713 = smul.addr %s2712, 28
        %s2714 = smul.addr %s2713, 4
        %s2715 = scalar_lea.vmem %s3, %s2714
      $region44: #{qconv_forward.1} parent=39 // pred_fallthru
        _
    $region40: #{qconv_forward.1} parent=5 // pred_fallthru
      _
  $region6: #{qconv_forward.1} parent=0 // loop_footer
    %s13 = sadd.s32 1, %s9
  $region7: #{qconv_forward.1} parent=0 // loop_footer_branch
    %8 = sbr.rel target = $region3
  $region8: #{qconv_forward.1} parent=0 // loop_exit
    _

</llo_original>
